<compile_context>
chip_gen: v6e
topology: v6e:2x2x1
jax: 0.10.0
libtpu: 0.0.40
codegen_flags: <defaults>
</compile_context>

<pallas_src>
import numpy as np
import jax
import jax.numpy as jnp
from jax.experimental import pallas as pl
from jax.experimental.pallas import tpu as pltpu


LEAD = 128  # lane-aligned start of the layer-1 slab inside the x2 scratch


# ----------------------------- Pallas kernel --------------------------------
def _make_fused_kernel(H, W, B_blk):
    """Fused conv3x3-bn-relu -> conv3x3-bn-relu kernel for B_blk images.

    Layout: channels on sublanes, flattened zero-padded spatial plane on lanes.
    x_ref    : (B_blk, Cin, (H+2)*(W+2))  bf16  flattened padded input planes
    w1_ref   : (C1, 9*Cin)                bf16  tap-stacked layer-1 weight (BN-scaled)
    b1_ref   : (C1, 1)                    f32   folded BN bias, layer 1
    w2_ref   : (C2, 9*C1)                 bf16  tap-stacked layer-2 weight (BN-scaled)
    b2_ref   : (C2, 1)                    f32   folded BN bias, layer 2
    mask_ref : (1, M1)                    f32   1.0 on valid columns, 0.0 on wrap
    o_ref    : (B_blk, C2, H*(W+2))       bf16  layer-2 output slab (NCHW-flat)
    x2_ref   : (C1, LEAD+M1+TPAD)         bf16  padded layer-2 input plane (scratch)
    xs1_ref  : (9*Cin, M1)                bf16  tap-stacked layer-1 operand (scratch)
    xs2_ref  : (9*C1, M2)                 bf16  tap-stacked layer-2 operand (scratch)
    """
    Wp = W + 2
    M1 = (H - 1) * Wp + W          # layer-1 slab: covers all valid outputs
    M2 = H * Wp                    # layer-2 output slab (garbage at w >= W)
    LPAD = Wp + 1                  # zero columns needed left of the h1 slab
    TPAD = Wp + 1 + (M2 - M1)      # zero columns needed right of the h1 slab
    assert LEAD >= LPAD, "image too wide for the fixed 128-lane lead pad"

    def kernel(x_ref, w1_ref, b1_ref, w2_ref, b2_ref, mask_ref, o_ref,
               x2_ref, xs1_ref, xs2_ref):
        C1 = w1_ref.shape[0]
        C2 = w2_ref.shape[0]
        Cin = w1_ref.shape[1] // 9

        # Zero only the pad columns layer 2 actually reads (~1.3 KB), once per
        # grid step.  The interior [LEAD, LEAD+M1) is fully rewritten for each
        # image below (wrap columns written as masked zeros), so this stays
        # correct when the "parallel" grid axis is sharded across TensorCores.
        x2_ref[:, pl.ds(LEAD - LPAD, LPAD)] = jnp.zeros((C1, LPAD), x2_ref.dtype)
        x2_ref[:, pl.ds(LEAD + M1, TPAD)] = jnp.zeros((C1, TPAD), x2_ref.dtype)

        for b in range(B_blk):
            # ---- layer 1: stack the 9 taps into K, one (C1,9Cin)@(9Cin,M1) matmul
            for t in range(9):
                kh, kw = divmod(t, 3)
                xs1_ref[pl.ds(t * Cin, Cin), :] = \
                    x_ref[b, :, pl.ds(kh * Wp + kw, M1)]
            acc1 = jnp.dot(w1_ref[...], xs1_ref[...],
                           preferred_element_type=jnp.float32)      # (C1, M1) f32
            # folded-BN bias + ReLU; the mask zeroes the wrap-around columns so
            # they act as the zero padding of the second conv.
            h1 = jnp.maximum(acc1 + b1_ref[...], 0.0) * mask_ref[...]

            # Lane-aligned (offset 128) unmasked store of the layer-1 slab.
            x2_ref[:, pl.ds(LEAD, M1)] = h1.astype(x2_ref.dtype)

            # ---- layer 2: stack the 9 taps into K, one (C2,9C1)@(9C1,M2) matmul
            for t in range(9):
                kh, kw = divmod(t, 3)
                xs2_ref[pl.ds(t * C1, C1), :] = \
                    x2_ref[:, pl.ds(LEAD - LPAD + kh * Wp + kw, M2)]
            acc2 = jnp.dot(w2_ref[...], xs2_ref[...],
                           preferred_element_type=jnp.float32)      # (C2, M2) f32
            o_ref[b, :, :] = jnp.maximum(acc2 + b2_ref[...], 0.0).astype(o_ref.dtype)

    return kernel


# -------------------------- one-time parameter prep --------------------------
def prepare_params(w1, s1, b1, w2, s2, b2):
    """Fold eval-mode BN scale into the conv weights, reorder to the tap-stacked
    (Cout, 9*Cin) layout matching the kernel's K ordering (t = kh*3+kw major,
    cin minor), and cast to bf16.  Call ONCE outside the jitted forward."""
    C1, Cin = w1.shape[0], w1.shape[1]
    C2 = w2.shape[0]
    w1f = (w1 * s1[:, None, None, None]).transpose(0, 2, 3, 1)
    w1f = w1f.reshape(C1, 9 * Cin).astype(jnp.bfloat16)
    w2f = (w2 * s2[:, None, None, None]).transpose(0, 2, 3, 1)
    w2f = w2f.reshape(C2, 9 * C1).astype(jnp.bfloat16)
    b1c = b1.reshape(C1, 1).astype(jnp.float32)
    b2c = b2.reshape(C2, 1).astype(jnp.float32)
    return w1f, b1c, w2f, b2c


def _pick_batch_block(N):
    """Images per grid step: amortize per-step overhead for large batches while
    keeping grid >= 2 so both v7x TensorCores get work."""
    for cand in (4, 3, 2):
        if N % cand == 0 and N // cand >= 2:
            return cand
    return 1


# ----------------------- PretrainedFeatureExtractor -------------------------
@jax.jit
def pretrained_feature_extractor_forward(x_nchw, w1f, b1c, w2f, b2c):
    """forward(x) = features(x): conv1-bn1-relu -> conv2-bn2-relu.

    Input NCHW float32; output NCHW bfloat16 (halves the dominant HBM
    writeback stream; cast to f32 downstream if full precision is required).
    """
    N, Cin, H, W = x_nchw.shape
    C1, C2 = b1c.shape[0], b2c.shape[0]
    Wp = W + 2
    S1 = (H + 2) * Wp              # flattened zero-padded input plane
    M1 = (H - 1) * Wp + W
    M2 = H * Wp
    TPAD = Wp + 1 + (M2 - M1)
    B_blk = _pick_batch_block(N)

    # Pad spatially once (SAME for 3x3 / stride 1), flatten the padded plane,
    # feed the MXU in bf16 (halves the HBM input stream; accumulation is f32).
    xp = jnp.pad(x_nchw, ((0, 0), (0, 0), (1, 1), (1, 1)))
    x_flat = xp.reshape(N, Cin, S1).astype(jnp.bfloat16)

    # Wrap-column validity mask: trace-time numpy constant (never recomputed
    # at runtime; avoids int-vector remainder inside the kernel).
    mask1 = jnp.asarray(((np.arange(M1) % Wp) < W)
                        .astype(np.float32).reshape(1, M1))

    out_flat = pl.pallas_call(
        _make_fused_kernel(H, W, B_blk),
        out_shape=jax.ShapeDtypeStruct((N, C2, M2), jnp.bfloat16),
        grid_spec=pltpu.PrefetchScalarGridSpec(
            num_scalar_prefetch=0,
            grid=(N // B_blk,),
            in_specs=[
                pl.BlockSpec((B_blk, Cin, S1), lambda n: (n, 0, 0)),
                pl.BlockSpec((C1, 9 * Cin), lambda n: (0, 0)),
                pl.BlockSpec((C1, 1), lambda n: (0, 0)),
                pl.BlockSpec((C2, 9 * C1), lambda n: (0, 0)),
                pl.BlockSpec((C2, 1), lambda n: (0, 0)),
                pl.BlockSpec((1, M1), lambda n: (0, 0)),
            ],
            out_specs=pl.BlockSpec((B_blk, C2, M2), lambda n: (n, 0, 0)),
            scratch_shapes=[
                pltpu.VMEM((C1, LEAD + M1 + TPAD), jnp.bfloat16),  # x2 plane
                pltpu.VMEM((9 * Cin, M1), jnp.bfloat16),           # stacked L1 operand
                pltpu.VMEM((9 * C1, M2), jnp.bfloat16),            # stacked L2 operand
            ],
        ),
        compiler_params=pltpu.CompilerParams(
            dimension_semantics=("parallel",)),
    )(x_flat, w1f, b1c, w2f, b2c, mask1)

    # The (N, C2, H*Wp) slab is already channel-major: reshape to NCHW and drop
    # the wrap-around garbage columns.
    return out_flat.reshape(N, C2, H, Wp)[:, :, :, :W]


# ------------------------------- parameters ----------------------------------
def init_params(key, cin=4, c1=16, c2=32, eps=1e-5):
    """Deterministic synthetic backbone params (conv weights + BN, folded)."""
    k1, k2, k3, k4, k5, k6 = jax.random.split(key, 6)

    w1 = jax.random.normal(k1, (c1, cin, 3, 3), jnp.float32) * 0.1
    g1 = 1.0 + 0.05 * jax.random.normal(k2, (c1,), jnp.float32)
    b1 = 0.05 * jax.random.normal(k3, (c1,), jnp.float32)
    mean1 = 0.01 * jnp.arange(c1, dtype=jnp.float32)
    var1 = 1.0 + 0.01 * jnp.arange(c1, dtype=jnp.float32)

    w2 = jax.random.normal(k4, (c2, c1, 3, 3), jnp.float32) * 0.1
    g2 = 1.0 + 0.05 * jax.random.normal(k5, (c2,), jnp.float32)
    b2 = 0.05 * jax.random.normal(k6, (c2,), jnp.float32)
    mean2 = 0.01 * jnp.arange(c2, dtype=jnp.float32)
    var2 = 1.0 + 0.01 * jnp.arange(c2, dtype=jnp.float32)

    # Fold eval-mode BN into per-channel scale/bias.
    s1 = g1 / jnp.sqrt(var1 + eps)
    bb1 = b1 - mean1 * s1
    s2 = g2 / jnp.sqrt(var2 + eps)
    bb2 = b2 - mean2 * s2

    return {"w1": w1, "s1": s1, "b1": bb1, "w2": w2, "s2": s2, "b2": bb2,
            "output_channels": c2}


# --------------------------- Pure-JAX reference ------------------------------
def _ref_block(x_nchw, w, scale, bias):
    y = jax.lax.conv_general_dilated(
        x_nchw, w, window_strides=(1, 1), padding="SAME",
        dimension_numbers=("NCHW", "OIHW", "NCHW"))
    y = y * scale[None, :, None, None] + bias[None, :, None, None]
    return jnp.maximum(y, 0.0)


def _ref_forward(x, p):
    h = _ref_block(x, p["w1"], p["s1"], p["b1"])
    return _ref_block(h, p["w2"], p["s2"], p["b2"])


# ---------------------------------- main -------------------------------------
if __name__ == "__main__":
    key = jax.random.PRNGKey(0)
    kx, kp = jax.random.split(key)

    # Small NCHW input consistent with a conv backbone.
    x = jax.random.normal(kx, (2, 4, 16, 16), jnp.float32)
    params = init_params(kp, cin=4, c1=16, c2=32)

    # One-time weight prep (hoisted out of the jitted forward).
    w1f, b1c, w2f, b2c = prepare_params(
        params["w1"], params["s1"], params["b1"],
        params["w2"], params["s2"], params["b2"])

    out = pretrained_feature_extractor_forward(x, w1f, b1c, w2f, b2c)
    out = jax.block_until_ready(out)

    assert out.shape == (2, params["output_channels"], 16, 16), out.shape

    ref = _ref_forward(x, params)
    out32 = out.astype(jnp.float32)
    max_err = float(jnp.max(jnp.abs(out32 - ref)))
    # bf16 MXU inputs + bf16 output slab -> looser tolerance vs the pure-f32
    # lax.conv reference (acceptable for a feature extractor).
    assert jnp.allclose(out32, ref, atol=5e-2, rtol=5e-2), max_err

    print("KERNEL_OK")
</pallas_src>

<mosaic_0001>
module attributes {stable_mosaic.version = 11 : i64} {
  func.func @kernel(%arg0: i32, %arg1: memref<1x4x324xbf16, #tpu.memory_space<vmem>>, %arg2: memref<16x36xbf16, #tpu.memory_space<vmem>>, %arg3: memref<16x1xf32, #tpu.memory_space<vmem>>, %arg4: memref<32x144xbf16, #tpu.memory_space<vmem>>, %arg5: memref<32x1xf32, #tpu.memory_space<vmem>>, %arg6: memref<1x286xf32, #tpu.memory_space<vmem>>, %arg7: memref<1x32x288xbf16, #tpu.memory_space<vmem>>, %arg8: memref<16x435xbf16, #tpu.memory_space<vmem>>, %arg9: memref<36x286xbf16, #tpu.memory_space<vmem>>, %arg10: memref<144x288xbf16, #tpu.memory_space<vmem>>) attributes {dimension_semantics = [#tpu.dimension_semantics<parallel>], iteration_bounds = array<i64: 2>, scalar_prefetch = 0 : i64, scratch_operands = 3 : i64, tpu.core_type = #tpu.core_type<tc>, window_params = [{transform_indices = @transform_0, window_bounds = array<i64: 1, 4, 324>}, {pipeline_mode = #tpu.pipeline_mode<synchronous>, transform_indices = @transform_1, window_bounds = array<i64: 16, 36>}, {pipeline_mode = #tpu.pipeline_mode<synchronous>, transform_indices = @transform_2, window_bounds = array<i64: 16, 1>}, {pipeline_mode = #tpu.pipeline_mode<synchronous>, transform_indices = @transform_3, window_bounds = array<i64: 32, 144>}, {pipeline_mode = #tpu.pipeline_mode<synchronous>, transform_indices = @transform_4, window_bounds = array<i64: 32, 1>}, {pipeline_mode = #tpu.pipeline_mode<synchronous>, transform_indices = @transform_5, window_bounds = array<i64: 1, 286>}, {transform_indices = @transform_6, window_bounds = array<i64: 1, 32, 288>}]} {
    %cst = arith.constant 0.000000e+00 : bf16
    %0 = vector.broadcast %cst : bf16 to vector<16x19xbf16>
    %c0 = arith.constant 0 : index
    %c109 = arith.constant 109 : index
    %1 = vector.load %arg8[%c0, %c109] : memref<16x435xbf16, #tpu.memory_space<vmem>>, vector<16x19xbf16>
    tpu.vector_store %arg8[%c0, %c109], %0 {strides = array<i32>} : memref<16x435xbf16, #tpu.memory_space<vmem>>, vector<16x19xbf16>,
    %cst_0 = arith.constant 0.000000e+00 : bf16
    %2 = vector.broadcast %cst_0 : bf16 to vector<16x21xbf16>
    %c0_1 = arith.constant 0 : index
    %c414 = arith.constant 414 : index
    %3 = vector.load %arg8[%c0_1, %c414] : memref<16x435xbf16, #tpu.memory_space<vmem>>, vector<16x21xbf16>
    tpu.vector_store %arg8[%c0_1, %c414], %2 {strides = array<i32>} : memref<16x435xbf16, #tpu.memory_space<vmem>>, vector<16x21xbf16>,
    %c0_2 = arith.constant 0 : index
    %c0_3 = arith.constant 0 : index
    %c0_4 = arith.constant 0 : index
    %4 = vector.load %arg1[%c0_2, %c0_3, %c0_4] : memref<1x4x324xbf16, #tpu.memory_space<vmem>>, vector<1x4x286xbf16>
    %5 = vector.shape_cast %4 : vector<1x4x286xbf16> to vector<4x286xbf16>
    %c0_5 = arith.constant 0 : index
    %c0_6 = arith.constant 0 : index
    %6 = vector.load %arg9[%c0_5, %c0_6] : memref<36x286xbf16, #tpu.memory_space<vmem>>, vector<4x286xbf16>
    tpu.vector_store %arg9[%c0_5, %c0_6], %5 {strides = array<i32>} : memref<36x286xbf16, #tpu.memory_space<vmem>>, vector<4x286xbf16>,
    %c0_7 = arith.constant 0 : index
    %c0_8 = arith.constant 0 : index
    %c1 = arith.constant 1 : index
    %7 = vector.load %arg1[%c0_7, %c0_8, %c1] : memref<1x4x324xbf16, #tpu.memory_space<vmem>>, vector<1x4x286xbf16>
    %8 = vector.shape_cast %7 : vector<1x4x286xbf16> to vector<4x286xbf16>
    %c4 = arith.constant 4 : index
    %c0_9 = arith.constant 0 : index
    %9 = vector.load %arg9[%c4, %c0_9] : memref<36x286xbf16, #tpu.memory_space<vmem>>, vector<4x286xbf16>
    tpu.vector_store %arg9[%c4, %c0_9], %8 {strides = array<i32>} : memref<36x286xbf16, #tpu.memory_space<vmem>>, vector<4x286xbf16>,
    %c0_10 = arith.constant 0 : index
    %c0_11 = arith.constant 0 : index
    %c2 = arith.constant 2 : index
    %10 = vector.load %arg1[%c0_10, %c0_11, %c2] : memref<1x4x324xbf16, #tpu.memory_space<vmem>>, vector<1x4x286xbf16>
    %11 = vector.shape_cast %10 : vector<1x4x286xbf16> to vector<4x286xbf16>
    %c8 = arith.constant 8 : index
    %c0_12 = arith.constant 0 : index
    %12 = vector.load %arg9[%c8, %c0_12] : memref<36x286xbf16, #tpu.memory_space<vmem>>, vector<4x286xbf16>
    tpu.vector_store %arg9[%c8, %c0_12], %11 {strides = array<i32>} : memref<36x286xbf16, #tpu.memory_space<vmem>>, vector<4x286xbf16>,
    %c0_13 = arith.constant 0 : index
    %c0_14 = arith.constant 0 : index
    %c18 = arith.constant 18 : index
    %13 = vector.load %arg1[%c0_13, %c0_14, %c18] : memref<1x4x324xbf16, #tpu.memory_space<vmem>>, vector<1x4x286xbf16>
    %14 = vector.shape_cast %13 : vector<1x4x286xbf16> to vector<4x286xbf16>
    %c12 = arith.constant 12 : index
    %c0_15 = arith.constant 0 : index
    %15 = vector.load %arg9[%c12, %c0_15] : memref<36x286xbf16, #tpu.memory_space<vmem>>, vector<4x286xbf16>
    tpu.vector_store %arg9[%c12, %c0_15], %14 {strides = array<i32>} : memref<36x286xbf16, #tpu.memory_space<vmem>>, vector<4x286xbf16>,
    %c0_16 = arith.constant 0 : index
    %c0_17 = arith.constant 0 : index
    %c19 = arith.constant 19 : index
    %16 = vector.load %arg1[%c0_16, %c0_17, %c19] : memref<1x4x324xbf16, #tpu.memory_space<vmem>>, vector<1x4x286xbf16>
    %17 = vector.shape_cast %16 : vector<1x4x286xbf16> to vector<4x286xbf16>
    %c16 = arith.constant 16 : index
    %c0_18 = arith.constant 0 : index
    %18 = vector.load %arg9[%c16, %c0_18] : memref<36x286xbf16, #tpu.memory_space<vmem>>, vector<4x286xbf16>
    tpu.vector_store %arg9[%c16, %c0_18], %17 {strides = array<i32>} : memref<36x286xbf16, #tpu.memory_space<vmem>>, vector<4x286xbf16>,
    %c0_19 = arith.constant 0 : index
    %c0_20 = arith.constant 0 : index
    %c20 = arith.constant 20 : index
    %19 = vector.load %arg1[%c0_19, %c0_20, %c20] : memref<1x4x324xbf16, #tpu.memory_space<vmem>>, vector<1x4x286xbf16>
    %20 = vector.shape_cast %19 : vector<1x4x286xbf16> to vector<4x286xbf16>
    %c20_21 = arith.constant 20 : index
    %c0_22 = arith.constant 0 : index
    %21 = vector.load %arg9[%c20_21, %c0_22] : memref<36x286xbf16, #tpu.memory_space<vmem>>, vector<4x286xbf16>
    tpu.vector_store %arg9[%c20_21, %c0_22], %20 {strides = array<i32>} : memref<36x286xbf16, #tpu.memory_space<vmem>>, vector<4x286xbf16>,
    %c0_23 = arith.constant 0 : index
    %c0_24 = arith.constant 0 : index
    %c36 = arith.constant 36 : index
    %22 = vector.load %arg1[%c0_23, %c0_24, %c36] : memref<1x4x324xbf16, #tpu.memory_space<vmem>>, vector<1x4x286xbf16>
    %23 = vector.shape_cast %22 : vector<1x4x286xbf16> to vector<4x286xbf16>
    %c24 = arith.constant 24 : index
    %c0_25 = arith.constant 0 : index
    %24 = vector.load %arg9[%c24, %c0_25] : memref<36x286xbf16, #tpu.memory_space<vmem>>, vector<4x286xbf16>
    tpu.vector_store %arg9[%c24, %c0_25], %23 {strides = array<i32>} : memref<36x286xbf16, #tpu.memory_space<vmem>>, vector<4x286xbf16>,
    %c0_26 = arith.constant 0 : index
    %c0_27 = arith.constant 0 : index
    %c37 = arith.constant 37 : index
    %25 = vector.load %arg1[%c0_26, %c0_27, %c37] : memref<1x4x324xbf16, #tpu.memory_space<vmem>>, vector<1x4x286xbf16>
    %26 = vector.shape_cast %25 : vector<1x4x286xbf16> to vector<4x286xbf16>
    %c28 = arith.constant 28 : index
    %c0_28 = arith.constant 0 : index
    %27 = vector.load %arg9[%c28, %c0_28] : memref<36x286xbf16, #tpu.memory_space<vmem>>, vector<4x286xbf16>
    tpu.vector_store %arg9[%c28, %c0_28], %26 {strides = array<i32>} : memref<36x286xbf16, #tpu.memory_space<vmem>>, vector<4x286xbf16>,
    %c0_29 = arith.constant 0 : index
    %c0_30 = arith.constant 0 : index
    %c38 = arith.constant 38 : index
    %28 = vector.load %arg1[%c0_29, %c0_30, %c38] : memref<1x4x324xbf16, #tpu.memory_space<vmem>>, vector<1x4x286xbf16>
    %29 = vector.shape_cast %28 : vector<1x4x286xbf16> to vector<4x286xbf16>
    %c32 = arith.constant 32 : index
    %c0_31 = arith.constant 0 : index
    %30 = vector.load %arg9[%c32, %c0_31] : memref<36x286xbf16, #tpu.memory_space<vmem>>, vector<4x286xbf16>
    tpu.vector_store %arg9[%c32, %c0_31], %29 {strides = array<i32>} : memref<36x286xbf16, #tpu.memory_space<vmem>>, vector<4x286xbf16>,
    %c0_32 = arith.constant 0 : index
    %c0_33 = arith.constant 0 : index
    %31 = vector.load %arg2[%c0_32, %c0_33] : memref<16x36xbf16, #tpu.memory_space<vmem>>, vector<16x36xbf16>
    %c0_34 = arith.constant 0 : index
    %c0_35 = arith.constant 0 : index
    %32 = vector.load %arg9[%c0_34, %c0_35] : memref<36x286xbf16, #tpu.memory_space<vmem>>, vector<36x286xbf16>
    %cst_36 = arith.constant dense<0.000000e+00> : vector<16x286xf32>
    %33 = tpu.matmul %31, %32, %cst_36 {dimension_numbers = #tpu.dot_dimension_numbers<[1], [0], [0], [1], [0, 0, 1, 1], [], []>} : vector<16x36xbf16>, vector<36x286xbf16>, vector<16x286xf32> -> vector<16x286xf32>
    %c0_37 = arith.constant 0 : index
    %c0_38 = arith.constant 0 : index
    %34 = vector.load %arg3[%c0_37, %c0_38] : memref<16x1xf32, #tpu.memory_space<vmem>>, vector<16x1xf32>
    %35 = vector.broadcast %34 : vector<16x1xf32> to vector<16x286xf32>
    %36 = arith.addf %33, %35 : vector<16x286xf32>
    %cst_39 = arith.constant 0.000000e+00 : f32
    %37 = vector.broadcast %cst_39 : f32 to vector<16x286xf32>
    %38 = arith.maximumf %36, %37 : vector<16x286xf32>
    %c0_40 = arith.constant 0 : index
    %c0_41 = arith.constant 0 : index
    %39 = vector.load %arg6[%c0_40, %c0_41] : memref<1x286xf32, #tpu.memory_space<vmem>>, vector<1x286xf32>
    %40 = vector.broadcast %39 : vector<1x286xf32> to vector<16x286xf32>
    %41 = arith.mulf %38, %40 : vector<16x286xf32>
    %42 = arith.truncf %41 : vector<16x286xf32> to vector<16x286xbf16>
    %c0_42 = arith.constant 0 : index
    %c128 = arith.constant 128 : index
    %43 = vector.load %arg8[%c0_42, %c128] : memref<16x435xbf16, #tpu.memory_space<vmem>>, vector<16x286xbf16>
    tpu.vector_store %arg8[%c0_42, %c128], %42 {strides = array<i32>} : memref<16x435xbf16, #tpu.memory_space<vmem>>, vector<16x286xbf16>,
    %c0_43 = arith.constant 0 : index
    %c109_44 = arith.constant 109 : index
    %44 = vector.load %arg8[%c0_43, %c109_44] : memref<16x435xbf16, #tpu.memory_space<vmem>>, vector<16x288xbf16>
    %c0_45 = arith.constant 0 : index
    %c0_46 = arith.constant 0 : index
    %45 = vector.load %arg10[%c0_45, %c0_46] : memref<144x288xbf16, #tpu.memory_space<vmem>>, vector<16x288xbf16>
    tpu.vector_store %arg10[%c0_45, %c0_46], %44 {strides = array<i32>} : memref<144x288xbf16, #tpu.memory_space<vmem>>, vector<16x288xbf16>,
    %c0_47 = arith.constant 0 : index
    %c110 = arith.constant 110 : index
    %46 = vector.load %arg8[%c0_47, %c110] : memref<16x435xbf16, #tpu.memory_space<vmem>>, vector<16x288xbf16>
    %c16_48 = arith.constant 16 : index
    %c0_49 = arith.constant 0 : index
    %47 = vector.load %arg10[%c16_48, %c0_49] : memref<144x288xbf16, #tpu.memory_space<vmem>>, vector<16x288xbf16>
    tpu.vector_store %arg10[%c16_48, %c0_49], %46 {strides = array<i32>} : memref<144x288xbf16, #tpu.memory_space<vmem>>, vector<16x288xbf16>,
    %c0_50 = arith.constant 0 : index
    %c111 = arith.constant 111 : index
    %48 = vector.load %arg8[%c0_50, %c111] : memref<16x435xbf16, #tpu.memory_space<vmem>>, vector<16x288xbf16>
    %c32_51 = arith.constant 32 : index
    %c0_52 = arith.constant 0 : index
    %49 = vector.load %arg10[%c32_51, %c0_52] : memref<144x288xbf16, #tpu.memory_space<vmem>>, vector<16x288xbf16>
    tpu.vector_store %arg10[%c32_51, %c0_52], %48 {strides = array<i32>} : memref<144x288xbf16, #tpu.memory_space<vmem>>, vector<16x288xbf16>,
    %c0_53 = arith.constant 0 : index
    %c127 = arith.constant 127 : index
    %50 = vector.load %arg8[%c0_53, %c127] : memref<16x435xbf16, #tpu.memory_space<vmem>>, vector<16x288xbf16>
    %c48 = arith.constant 48 : index
    %c0_54 = arith.constant 0 : index
    %51 = vector.load %arg10[%c48, %c0_54] : memref<144x288xbf16, #tpu.memory_space<vmem>>, vector<16x288xbf16>
    tpu.vector_store %arg10[%c48, %c0_54], %50 {strides = array<i32>} : memref<144x288xbf16, #tpu.memory_space<vmem>>, vector<16x288xbf16>,
    %c0_55 = arith.constant 0 : index
    %c128_56 = arith.constant 128 : index
    %52 = vector.load %arg8[%c0_55, %c128_56] : memref<16x435xbf16, #tpu.memory_space<vmem>>, vector<16x288xbf16>
    %c64 = arith.constant 64 : index
    %c0_57 = arith.constant 0 : index
    %53 = vector.load %arg10[%c64, %c0_57] : memref<144x288xbf16, #tpu.memory_space<vmem>>, vector<16x288xbf16>
    tpu.vector_store %arg10[%c64, %c0_57], %52 {strides = array<i32>} : memref<144x288xbf16, #tpu.memory_space<vmem>>, vector<16x288xbf16>,
    %c0_58 = arith.constant 0 : index
    %c129 = arith.constant 129 : index
    %54 = vector.load %arg8[%c0_58, %c129] : memref<16x435xbf16, #tpu.memory_space<vmem>>, vector<16x288xbf16>
    %c80 = arith.constant 80 : index
    %c0_59 = arith.constant 0 : index
    %55 = vector.load %arg10[%c80, %c0_59] : memref<144x288xbf16, #tpu.memory_space<vmem>>, vector<16x288xbf16>
    tpu.vector_store %arg10[%c80, %c0_59], %54 {strides = array<i32>} : memref<144x288xbf16, #tpu.memory_space<vmem>>, vector<16x288xbf16>,
    %c0_60 = arith.constant 0 : index
    %c145 = arith.constant 145 : index
    %56 = vector.load %arg8[%c0_60, %c145] : memref<16x435xbf16, #tpu.memory_space<vmem>>, vector<16x288xbf16>
    %c96 = arith.constant 96 : index
    %c0_61 = arith.constant 0 : index
    %57 = vector.load %arg10[%c96, %c0_61] : memref<144x288xbf16, #tpu.memory_space<vmem>>, vector<16x288xbf16>
    tpu.vector_store %arg10[%c96, %c0_61], %56 {strides = array<i32>} : memref<144x288xbf16, #tpu.memory_space<vmem>>, vector<16x288xbf16>,
    %c0_62 = arith.constant 0 : index
    %c146 = arith.constant 146 : index
    %58 = vector.load %arg8[%c0_62, %c146] : memref<16x435xbf16, #tpu.memory_space<vmem>>, vector<16x288xbf16>
    %c112 = arith.constant 112 : index
    %c0_63 = arith.constant 0 : index
    %59 = vector.load %arg10[%c112, %c0_63] : memref<144x288xbf16, #tpu.memory_space<vmem>>, vector<16x288xbf16>
    tpu.vector_store %arg10[%c112, %c0_63], %58 {strides = array<i32>} : memref<144x288xbf16, #tpu.memory_space<vmem>>, vector<16x288xbf16>,
    %c0_64 = arith.constant 0 : index
    %c147 = arith.constant 147 : index
    %60 = vector.load %arg8[%c0_64, %c147] : memref<16x435xbf16, #tpu.memory_space<vmem>>, vector<16x288xbf16>
    %c128_65 = arith.constant 128 : index
    %c0_66 = arith.constant 0 : index
    %61 = vector.load %arg10[%c128_65, %c0_66] : memref<144x288xbf16, #tpu.memory_space<vmem>>, vector<16x288xbf16>
    tpu.vector_store %arg10[%c128_65, %c0_66], %60 {strides = array<i32>} : memref<144x288xbf16, #tpu.memory_space<vmem>>, vector<16x288xbf16>,
    %c0_67 = arith.constant 0 : index
    %c0_68 = arith.constant 0 : index
    %62 = vector.load %arg4[%c0_67, %c0_68] : memref<32x144xbf16, #tpu.memory_space<vmem>>, vector<32x144xbf16>
    %c0_69 = arith.constant 0 : index
    %c0_70 = arith.constant 0 : index
    %63 = vector.load %arg10[%c0_69, %c0_70] : memref<144x288xbf16, #tpu.memory_space<vmem>>, vector<144x288xbf16>
    %cst_71 = arith.constant dense<0.000000e+00> : vector<32x288xf32>
    %64 = tpu.matmul %62, %63, %cst_71 {dimension_numbers = #tpu.dot_dimension_numbers<[1], [0], [0], [1], [0, 0, 1, 1], [], []>} : vector<32x144xbf16>, vector<144x288xbf16>, vector<32x288xf32> -> vector<32x288xf32>
    %c0_72 = arith.constant 0 : index
    %c0_73 = arith.constant 0 : index
    %65 = vector.load %arg5[%c0_72, %c0_73] : memref<32x1xf32, #tpu.memory_space<vmem>>, vector<32x1xf32>
    %66 = vector.broadcast %65 : vector<32x1xf32> to vector<32x288xf32>
    %67 = arith.addf %64, %66 : vector<32x288xf32>
    %cst_74 = arith.constant 0.000000e+00 : f32
    %68 = vector.broadcast %cst_74 : f32 to vector<32x288xf32>
    %69 = arith.maximumf %67, %68 : vector<32x288xf32>
    %70 = arith.truncf %69 : vector<32x288xf32> to vector<32x288xbf16>
    %c0_75 = arith.constant 0 : index
    %c0_76 = arith.constant 0 : index
    %c0_77 = arith.constant 0 : index
    %71 = vector.load %arg7[%c0_75, %c0_76, %c0_77] : memref<1x32x288xbf16, #tpu.memory_space<vmem>>, vector<1x32x288xbf16>
    %72 = vector.shape_cast %71 : vector<1x32x288xbf16> to vector<32x288xbf16>
    %73 = vector.shape_cast %70 : vector<32x288xbf16> to vector<1x32x288xbf16>
    tpu.vector_store %arg7[%c0_75, %c0_76, %c0_77], %73 {strides = array<i32>} : memref<1x32x288xbf16, #tpu.memory_space<vmem>>, vector<1x32x288xbf16>,
    return
  }
  func.func @transform_0(%arg0: i32) -> (i32, i32, i32) {
    %c0_i32 = arith.constant 0 : i32
    %c0_i32_0 = arith.constant 0 : i32
    %c0_i32_1 = arith.constant 0 : i32
    return %arg0, %c0_i32, %c0_i32_0 : i32, i32, i32
  }
  func.func @transform_1(%arg0: i32) -> (i32, i32) {
    %c0_i32 = arith.constant 0 : i32
    %c0_i32_0 = arith.constant 0 : i32
    %c0_i32_1 = arith.constant 0 : i32
    return %c0_i32, %c0_i32_0 : i32, i32
  }
  func.func @transform_2(%arg0: i32) -> (i32, i32) {
    %c0_i32 = arith.constant 0 : i32
    %c0_i32_0 = arith.constant 0 : i32
    %c0_i32_1 = arith.constant 0 : i32
    return %c0_i32, %c0_i32_0 : i32, i32
  }
  func.func @transform_3(%arg0: i32) -> (i32, i32) {
    %c0_i32 = arith.constant 0 : i32
    %c0_i32_0 = arith.constant 0 : i32
    %c0_i32_1 = arith.constant 0 : i32
    return %c0_i32, %c0_i32_0 : i32, i32
  }
  func.func @transform_4(%arg0: i32) -> (i32, i32) {
    %c0_i32 = arith.constant 0 : i32
    %c0_i32_0 = arith.constant 0 : i32
    %c0_i32_1 = arith.constant 0 : i32
    return %c0_i32, %c0_i32_0 : i32, i32
  }
  func.func @transform_5(%arg0: i32) -> (i32, i32) {
    %c0_i32 = arith.constant 0 : i32
    %c0_i32_0 = arith.constant 0 : i32
    %c0_i32_1 = arith.constant 0 : i32
    return %c0_i32, %c0_i32_0 : i32, i32
  }
  func.func @transform_6(%arg0: i32) -> (i32, i32, i32) {
    %c0_i32 = arith.constant 0 : i32
    %c0_i32_0 = arith.constant 0 : i32
    %c0_i32_1 = arith.constant 0 : i32
    return %arg0, %c0_i32, %c0_i32_0 : i32, i32, i32
  }
}

</mosaic_0001>

<llo_original>
// kernel: pretrained_feature_extractor_forward.1
$region0: #{pretrained_feature_extractor_forward.1}
  #allocation0 [shape = 'u32[]', space=smem, size = 0x4, offset = 0x4, fixed_abs, tag = 'smem constant byte address 0x4 - core index']
  #allocation1 [shape = 'u32[144,128]{1,0:T(1,128)}', space=vmem, size = 0x12000, scoped, tag = 'internal scratch']
  #allocation2 [shape = 'bf16[16,435]{1,0:T(8,128)(2,1)}', space=vmem, size = 0x4000, scoped, tag = 'scratch operand']
  #allocation3 [shape = 'bf16[36,286]{1,0:T(8,128)(2,1)}', space=vmem, size = 0x7800, scoped, tag = 'scratch operand']
  #allocation4 [shape = 'bf16[144,288]{1,0:T(8,128)(2,1)}', space=vmem, size = 0x1b000, scoped, tag = 'scratch operand']
  %s0 = inlined_call_operand.vmem [shape: bf16[2,4,324], index: 0, kind: input, shape index: {}]
  %s1 = inlined_call_operand.vmem [shape: bf16[16,36], index: 1, kind: input, shape index: {}]
  %s2 = inlined_call_operand.vmem [shape: f32[16,1], index: 2, kind: input, shape index: {}]
  %s3 = inlined_call_operand.vmem [shape: bf16[32,144], index: 3, kind: input, shape index: {}]
  %s4 = inlined_call_operand.vmem [shape: f32[32,1], index: 4, kind: input, shape index: {}]
  %s5 = inlined_call_operand.vmem [shape: f32[1,286], index: 5, kind: input, shape index: {}]
  %s6 = inlined_call_operand.vmem [shape: bf16[2,32,288], index: 6, kind: output, shape index: {}]
  %s7 = sld [smem:[#allocation0]]
  $region57: #{pretrained_feature_extractor_forward.1} parent=0
    _
  %s9 = ssub.s32 1, %s7
  %s10 = scalar_select 0, %s9, %s7
  loop: start=0, step=1, limit=4
  $region2: #{pretrained_feature_extractor_forward.1} parent=0 // loop_pre_header
    _
  $region3: #{pretrained_feature_extractor_forward.1} parent=0 // loop_header
    %s12 = sphi 0, %s16
    %p13 = scmp.ge.s32.totalorder %s12, 4
    %s22 = sphi 0, %s24
    %s25 = sphi 0, %s22
    %s26 = sphi 0, %s25
    %s42 = sphi 0, %s26
    %s46 = sphi 0, %s46
    %s48 = sphi 0, %s46
    %s49 = sphi 0, %s48
    %s63 = sphi 0, %s49
    %s67 = sphi 0, %s67
    %s69 = sphi 0, %s67
    %s70 = sphi 0, %s69
    %s84 = sphi 0, %s70
    %s88 = sphi 0, %s88
    %s90 = sphi 0, %s88
    %s91 = sphi 0, %s90
    %s105 = sphi 0, %s91
    %s109 = sphi 0, %s109
    %s111 = sphi 0, %s109
    %s112 = sphi 0, %s111
    %s126 = sphi 0, %s112
    %s130 = sphi 0, %s130
    %s132 = sphi 0, %s130
    %s133 = sphi 0, %s132
    %s147 = sphi 0, %s133
    %s153 = sphi 0, %s155
    %s156 = sphi 0, %s153
    %s157 = sphi 0, %s156
    %s173 = sphi 0, %s157
  $region4: #{pretrained_feature_extractor_forward.1} parent=0 // loop_header_branch
    %15 = sbr.rel (%p13) target = $region8
  $region5: #{pretrained_feature_extractor_forward.1} parent=0 // loop_body
    %s17 = ssub.s32 %s12, 1
    %s18 = ssub.s32 %s12, 2
    %s19 = sadd.s32 %s12, 1
    %s20 = ssub.s32 %s12, %s19
    %p21 = scmp.eq.s32.totalorder %s20, 0
    %s23 = sadd.s32 %s22, 1
    %s24 = scalar_select %p21, %s22, %s23
    %p27 = pneg %p21
    %p28 = scmp.eq.s32.totalorder %s12, 1
    %p29 = por %p27, %p28
    %p30 = scmp.ne.s32.totalorder %s22, %s25
    %p31 = scmp.eq.s32.totalorder %s12, 0
    %p32 = por %p30, %p31
    %p33 = scmp.ne.s32.totalorder %s22, %s25
    %p34 = scmp.eq.s32.totalorder %s17, 1
    %p35 = por %p33, %p34
    %p36 = scmp.ne.s32.totalorder %s25, %s26
    %p37 = scmp.eq.s32.totalorder %s17, 0
    %p38 = por %p36, %p37
    %p39 = scmp.ne.s32.totalorder %s25, %s26
    %p40 = scmp.eq.s32.totalorder %s18, 1
    %p41 = por %p39, %p40
    %p43 = scmp.ne.s32.totalorder %s26, %s42
    %p44 = scmp.eq.s32.totalorder %s18, 0
    %p45 = por %p43, %p44
    %s47 = sadd.s32 %s46, 1
    %p50 = scmp.eq.s32.totalorder %s12, 1
    %p51 = scmp.ne.s32.totalorder %s46, %s48
    %p52 = scmp.eq.s32.totalorder %s12, 0
    %p53 = por %p51, %p52
    %p54 = scmp.ne.s32.totalorder %s46, %s48
    %p55 = scmp.eq.s32.totalorder %s17, 1
    %p56 = por %p54, %p55
    %p57 = scmp.ne.s32.totalorder %s48, %s49
    %p58 = scmp.eq.s32.totalorder %s17, 0
    %p59 = por %p57, %p58
    %p60 = scmp.ne.s32.totalorder %s48, %s49
    %p61 = scmp.eq.s32.totalorder %s18, 1
    %p62 = por %p60, %p61
    %p64 = scmp.ne.s32.totalorder %s49, %s63
    %p65 = scmp.eq.s32.totalorder %s18, 0
    %p66 = por %p64, %p65
    %s68 = sadd.s32 %s67, 1
    %p71 = scmp.eq.s32.totalorder %s12, 1
    %p72 = scmp.ne.s32.totalorder %s67, %s69
    %p73 = scmp.eq.s32.totalorder %s12, 0
    %p74 = por %p72, %p73
    %p75 = scmp.ne.s32.totalorder %s67, %s69
    %p76 = scmp.eq.s32.totalorder %s17, 1
    %p77 = por %p75, %p76
    %p78 = scmp.ne.s32.totalorder %s69, %s70
    %p79 = scmp.eq.s32.totalorder %s17, 0
    %p80 = por %p78, %p79
    %p81 = scmp.ne.s32.totalorder %s69, %s70
    %p82 = scmp.eq.s32.totalorder %s18, 1
    %p83 = por %p81, %p82
    %p85 = scmp.ne.s32.totalorder %s70, %s84
    %p86 = scmp.eq.s32.totalorder %s18, 0
    %p87 = por %p85, %p86
    %s89 = sadd.s32 %s88, 1
    %p92 = scmp.eq.s32.totalorder %s12, 1
    %p93 = scmp.ne.s32.totalorder %s88, %s90
    %p94 = scmp.eq.s32.totalorder %s12, 0
    %p95 = por %p93, %p94
    %p96 = scmp.ne.s32.totalorder %s88, %s90
    %p97 = scmp.eq.s32.totalorder %s17, 1
    %p98 = por %p96, %p97
    %p99 = scmp.ne.s32.totalorder %s90, %s91
    %p100 = scmp.eq.s32.totalorder %s17, 0
    %p101 = por %p99, %p100
    %p102 = scmp.ne.s32.totalorder %s90, %s91
    %p103 = scmp.eq.s32.totalorder %s18, 1
    %p104 = por %p102, %p103
    %p106 = scmp.ne.s32.totalorder %s91, %s105
    %p107 = scmp.eq.s32.totalorder %s18, 0
    %p108 = por %p106, %p107
    %s110 = sadd.s32 %s109, 1
    %p113 = scmp.eq.s32.totalorder %s12, 1
    %p114 = scmp.ne.s32.totalorder %s109, %s111
    %p115 = scmp.eq.s32.totalorder %s12, 0
    %p116 = por %p114, %p115
    %p117 = scmp.ne.s32.totalorder %s109, %s111
    %p118 = scmp.eq.s32.totalorder %s17, 1
    %p119 = por %p117, %p118
    %p120 = scmp.ne.s32.totalorder %s111, %s112
    %p121 = scmp.eq.s32.totalorder %s17, 0
    %p122 = por %p120, %p121
    %p123 = scmp.ne.s32.totalorder %s111, %s112
    %p124 = scmp.eq.s32.totalorder %s18, 1
    %p125 = por %p123, %p124
    %p127 = scmp.ne.s32.totalorder %s112, %s126
    %p128 = scmp.eq.s32.totalorder %s18, 0
    %p129 = por %p127, %p128
    %s131 = sadd.s32 %s130, 1
    %p134 = scmp.eq.s32.totalorder %s12, 1
    %p135 = scmp.ne.s32.totalorder %s130, %s132
    %p136 = scmp.eq.s32.totalorder %s12, 0
    %p137 = por %p135, %p136
    %p138 = scmp.ne.s32.totalorder %s130, %s132
    %p139 = scmp.eq.s32.totalorder %s17, 1
    %p140 = por %p138, %p139
    %p141 = scmp.ne.s32.totalorder %s132, %s133
    %p142 = scmp.eq.s32.totalorder %s17, 0
    %p143 = por %p141, %p142
    %p144 = scmp.ne.s32.totalorder %s132, %s133
    %p145 = scmp.eq.s32.totalorder %s18, 1
    %p146 = por %p144, %p145
    %p148 = scmp.ne.s32.totalorder %s133, %s147
    %p149 = scmp.eq.s32.totalorder %s18, 0
    %p150 = por %p148, %p149
    %s151 = ssub.s32 %s12, %s19
    %p152 = scmp.eq.s32.totalorder %s151, 0
    %s154 = sadd.s32 %s153, 1
    %s155 = scalar_select %p152, %s153, %s154
    %p158 = pneg %p152
    %p159 = scmp.eq.s32.totalorder %s12, 1
    %p160 = por %p158, %p159
    %p161 = scmp.ne.s32.totalorder %s153, %s156
    %p162 = scmp.eq.s32.totalorder %s12, 0
    %p163 = por %p161, %p162
    %p164 = scmp.ne.s32.totalorder %s153, %s156
    %p165 = scmp.eq.s32.totalorder %s17, 1
    %p166 = por %p164, %p165
    %p167 = scmp.ne.s32.totalorder %s156, %s157
    %p168 = scmp.eq.s32.totalorder %s17, 0
    %p169 = por %p167, %p168
    %p170 = scmp.ne.s32.totalorder %s156, %s157
    %p171 = scmp.eq.s32.totalorder %s18, 1
    %p172 = por %p170, %p171
    %p174 = scmp.ne.s32.totalorder %s157, %s173
    %p175 = scmp.eq.s32.totalorder %s18, 0
    %p176 = por %p174, %p175
    %p177 = scmp.le.s32.totalorder 1, %s12
    %p178 = scmp.lt.s32.totalorder %s12, 3
    %p179 = pnand %p177, %p178
    %p180 = pneg %p179
    // Predicated region
    $region9: #{pretrained_feature_extractor_forward.1} parent=5 // pred_check
      _
    $region10: #{pretrained_feature_extractor_forward.1} parent=5 // pred_check_branch
      %182 = sbr.rel (%p179) target = $region12
    $region11: #{pretrained_feature_extractor_forward.1} parent=5 // pred_region
      %s183 = ssub.s32 %s12, 1
      // Predicated region
      $region13: #{pretrained_feature_extractor_forward.1} parent=11 // pred_check
        %p184 = pneg %p59
      $region14: #{pretrained_feature_extractor_forward.1} parent=11 // pred_check_branch
        %186 = sbr.rel (%p184) target = $region16
      $region15: #{pretrained_feature_extractor_forward.1} parent=11 // pred_region
        _
      $region16: #{pretrained_feature_extractor_forward.1} parent=11 // pred_fallthru
        _
      // Predicated region
      $region17: #{pretrained_feature_extractor_forward.1} parent=11 // pred_check
        %p187 = pneg %p80
      $region18: #{pretrained_feature_extractor_forward.1} parent=11 // pred_check_branch
        %189 = sbr.rel (%p187) target = $region20
      $region19: #{pretrained_feature_extractor_forward.1} parent=11 // pred_region
        _
      $region20: #{pretrained_feature_extractor_forward.1} parent=11 // pred_fallthru
        _
      // Predicated region
      $region21: #{pretrained_feature_extractor_forward.1} parent=11 // pred_check
        %p190 = pneg %p101
      $region22: #{pretrained_feature_extractor_forward.1} parent=11 // pred_check_branch
        %192 = sbr.rel (%p190) target = $region24
      $region23: #{pretrained_feature_extractor_forward.1} parent=11 // pred_region
        _
      $region24: #{pretrained_feature_extractor_forward.1} parent=11 // pred_fallthru
        _
      // Predicated region
      $region25: #{pretrained_feature_extractor_forward.1} parent=11 // pred_check
        %p193 = pneg %p122
      $region26: #{pretrained_feature_extractor_forward.1} parent=11 // pred_check_branch
        %195 = sbr.rel (%p193) target = $region28
      $region27: #{pretrained_feature_extractor_forward.1} parent=11 // pred_region
        _
      $region28: #{pretrained_feature_extractor_forward.1} parent=11 // pred_fallthru
        _
      // Predicated region
      $region29: #{pretrained_feature_extractor_forward.1} parent=11 // pred_check
        %p196 = pneg %p143
      $region30: #{pretrained_feature_extractor_forward.1} parent=11 // pred_check_branch
        %198 = sbr.rel (%p196) target = $region32
      $region31: #{pretrained_feature_extractor_forward.1} parent=11 // pred_region
        _
      $region32: #{pretrained_feature_extractor_forward.1} parent=11 // pred_fallthru
        _
    $region12: #{pretrained_feature_extractor_forward.1} parent=5 // pred_fallthru
      _
    %p199 = scmp.lt.s32.totalorder %s12, 2
    // Predicated region
    $region33: #{pretrained_feature_extractor_forward.1} parent=5 // pred_check
      %p200 = pneg %p199
    $region34: #{pretrained_feature_extractor_forward.1} parent=5 // pred_check_branch
      %202 = sbr.rel (%p200) target = $region36
    $region35: #{pretrained_feature_extractor_forward.1} parent=5 // pred_region
      // Predicated region
      $region37: #{pretrained_feature_extractor_forward.1} parent=35 // pred_check
        %p203 = pneg %p32
      $region38: #{pretrained_feature_extractor_forward.1} parent=35 // pred_check_branch
        %205 = sbr.rel (%p203) target = $region40
      $region39: #{pretrained_feature_extractor_forward.1} parent=35 // pred_region
        %p206 = scmp.lt.s32.totalorder %s12, 1
        %s207 = scalar_select %p206, %s12, 1
        %s208 = smul.addr %s207, 3
        %s209 = smul.addr %s208, 2
        %s210 = scalar_lea.vmem %s0, %s209
      $region40: #{pretrained_feature_extractor_forward.1} parent=35 // pred_fallthru
        _
    $region36: #{pretrained_feature_extractor_forward.1} parent=5 // pred_fallthru
      _
    %p211 = scmp.le.s32.totalorder 1, %s12
    %p212 = scmp.lt.s32.totalorder %s12, 3
    %p213 = pnand %p211, %p212
    %p214 = pneg %p213
    // Predicated region
    $region41: #{pretrained_feature_extractor_forward.1} parent=5 // pred_check
      _
    $region42: #{pretrained_feature_extractor_forward.1} parent=5 // pred_check_branch
      %216 = sbr.rel (%p213) target = $region44
    $region43: #{pretrained_feature_extractor_forward.1} parent=5 // pred_region
      %s217 = ssub.s32 %s12, 1
      %p218 = scmp.lt.s32.totalorder %s17, 1
      %s219 = scalar_select %p218, %s17, 1
      %s220 = smul.addr %s219, 3
      %s221 = smul.addr %s220, 2
      %s222 = scalar_lea.vmem %s0, %s221
      %p223 = pneg %p38
      %p224 = pneg %p35
      %p225 = pneg %p59
      %p226 = pneg %p56
      %p227 = pneg %p80
      %p228 = pneg %p77
      %p229 = pneg %p101
      %p230 = pneg %p98
      %p231 = pneg %p122
      %p232 = pneg %p119
      %p233 = pneg %p143
      %p234 = pneg %p140
      %p235 = pneg %p169
      %p236 = pneg %p166
      %p237 = scmp.lt.s32.totalorder %s17, 1
      %s238 = scalar_select %p237, %s17, 1
      %s239 = smul.addr %s238, 12
      %s240 = smul.addr %s239, 4
      %s241 = scalar_lea.vmem %s6, %s240
      %p242 = scmp.lt.s32.totalorder %s17, 1
      %s243 = scalar_select %p242, %s17, 1
      %s244 = smul.addr %s243, 3
      %s245 = smul.addr %s244, 2
      %s246 = scalar_lea.vmem %s0, %s245
      %p247 = scmp.lt.s32.totalorder %s17, 1
      %s248 = scalar_select %p247, %s17, 1
      %s249 = smul.addr %s248, 12
      %s250 = smul.addr %s249, 4
      %s251 = scalar_lea.vmem %s6, %s250
      %vm253 = vcmask 1044328
      %254 = vst.msk [vmem:[#allocation2] sm:$0xf] %vm253, 0
      %255 = vst.msk [vmem:[#allocation2 + $0x10] sm:$0xf] %vm253, 0
      %vm256 = vcmask 412912
      %257 = vst.msk [vmem:[#allocation2 + $0xc] sm:$0xf] %vm256, 0
      %258 = vst.msk [vmem:[#allocation2 + $0x1c] sm:$0xf] %vm256, 0
      %v259 = vld [vmem:[%s246] sm:$0x3f]
      %v261 = vcombine.high %v259, %v259
      %v263 = vunpack.c.l.s4 1983009808
      %v264 = vunpack.c.0.s8 %v263
      %v265 = vlaneseq
      %v266 = vshrl.u32 %v265, 7
      %v267 = vsub.s32 %v264, %v266
      %v268 = vrot.slane %v259, %v267
      %v270 = vunpack.c.l.s4 1983009808
      %v271 = vunpack.c.0.s8 %v270
      %v272 = vlaneseq
      %v273 = vshrl.u32 %v272, 7
      %v274 = vsub.s32 %v271, %v273
      %v275 = vrot.slane %v261, %v274
      %278 = vst [vmem:[#allocation3] sm:$0x33] %v268
      %vm279 = vcmask 238592
      %280 = vst.msk [vmem:[#allocation3 + $0x8] sm:$0x3] %vm279, %v275
      %v281 = vld [vmem:[%s246] sm:$0x3f]
      %v283 = vcombine.low %v281, %v281
      %v285 = vunpack.c.l.s4 1983009808
      %v286 = vunpack.c.0.s8 %v285
      %v287 = vlaneseq
      %v288 = vshrl.u32 %v287, 7
      %v289 = vsub.s32 %v286, %v288
      %v290 = vrot.slane %v283, %v289
      %v292 = vunpack.c.l.s4 1983009808
      %v293 = vunpack.c.0.s8 %v292
      %v294 = vlaneseq
      %v295 = vshrl.u32 %v294, 7
      %v296 = vsub.s32 %v293, %v295
      %v297 = vrot.slane %v281, %v296
      %298 = vrot.lane.b32.xlu0 %v290, 127
      %v299 = vpop.permute.xlu0 %298
      %300 = vrot.lane.b32.xlu0 %v297, 127
      %v301 = vpop.permute.xlu0 %300
      %v302 = vrot.slane %v299, 4
      %v303 = vrot.slane %v301, 4
      %vm304 = vcmask 1043456
      %v305 = vsel %vm304, %v302, %v303
      %vm306 = vcmask 1039360
      %v307 = vsel %vm306, %v299, %v305
      %310 = vst [vmem:[#allocation3] sm:$0xcc] %v307
      %vm311 = vcmask 240642
      %312 = vst.msk [vmem:[#allocation3 + $0x8] sm:$0xc] %vm311, %v301
      %v313 = vld [vmem:[%s246] sm:$0x3f]
      %v315 = vcombine.high %v313, %v313
      %v317 = vunpack.c.l.s4 1983009808
      %v318 = vunpack.c.0.s8 %v317
      %v319 = vlaneseq
      %v320 = vshrl.u32 %v319, 7
      %v321 = vsub.s32 %v318, %v320
      %v322 = vrot.slane %v313, %v321
      %v324 = vunpack.c.l.s4 1983009808
      %v325 = vunpack.c.0.s8 %v324
      %v326 = vlaneseq
      %v327 = vshrl.u32 %v326, 7
      %v328 = vsub.s32 %v325, %v327
      %v329 = vrot.slane %v315, %v328
      %330 = vrot.lane.b32.xlu0 %v322, 126
      %v331 = vpop.permute.xlu0 %330
      %332 = vrot.lane.b32.xlu0 %v329, 126
      %v333 = vpop.permute.xlu0 %332
      %v334 = vrot.slane %v331, 4
      %v335 = vrot.slane %v333, 4
      %v336 = vsel %vm304, %v334, %v335
      %vm337 = vcmask 1031168
      %v338 = vsel %vm337, %v331, %v336
      %341 = vst [vmem:[#allocation3 + $0xc] sm:$0x33] %v338
      %342 = vst.msk [vmem:[#allocation3 + $0x14] sm:$0x3] %vm279, %v333
      %v343 = vld [vmem:[%s246] sm:$0x3f]
      %v345 = vcombine.low %v343, %v343
      %v347 = vunpack.c.l.s4 1983009808
      %v348 = vunpack.c.0.s8 %v347
      %v349 = vlaneseq
      %v350 = vshrl.u32 %v349, 7
      %v351 = vsub.s32 %v348, %v350
      %v352 = vrot.slane %v345, %v351
      %v354 = vunpack.c.l.s4 1983009808
      %v355 = vunpack.c.0.s8 %v354
      %v356 = vlaneseq
      %v357 = vshrl.u32 %v356, 7
      %v358 = vsub.s32 %v355, %v357
      %v359 = vrot.slane %v343, %v358
      %360 = vrot.lane.b32.xlu0 %v352, 110
      %v361 = vpop.permute.xlu0 %360
      %362 = vrot.lane.b32.xlu0 %v359, 110
      %v363 = vpop.permute.xlu0 %362
      %v364 = vrot.slane %v361, 4
      %v365 = vrot.slane %v363, 4
      %v366 = vsel %vm304, %v364, %v365
      %vm367 = vcmask 900096
      %v368 = vsel %vm367, %v361, %v366
      %371 = vst [vmem:[#allocation3 + $0xc] sm:$0xcc] %v368
      %372 = vst.msk [vmem:[#allocation3 + $0x14] sm:$0xc] %vm311, %v363
      %v373 = vld [vmem:[%s246] sm:$0x3f]
      %v375 = vcombine.high %v373, %v373
      %v377 = vunpack.c.l.s4 1983009808
      %v378 = vunpack.c.0.s8 %v377
      %v379 = vlaneseq
      %v380 = vshrl.u32 %v379, 7
      %v381 = vsub.s32 %v378, %v380
      %v382 = vrot.slane %v373, %v381
      %v384 = vunpack.c.l.s4 1983009808
      %v385 = vunpack.c.0.s8 %v384
      %v386 = vlaneseq
      %v387 = vshrl.u32 %v386, 7
      %v388 = vsub.s32 %v385, %v387
      %v389 = vrot.slane %v375, %v388
      %390 = vrot.lane.b32.xlu0 %v382, 109
      %v391 = vpop.permute.xlu0 %390
      %392 = vrot.lane.b32.xlu0 %v389, 109
      %v393 = vpop.permute.xlu0 %392
      %v394 = vrot.slane %v391, 4
      %v395 = vrot.slane %v393, 4
      %v396 = vsel %vm304, %v394, %v395
      %vm397 = vcmask 891904
      %v398 = vsel %vm397, %v391, %v396
      %401 = vst [vmem:[#allocation3 + $0x18] sm:$0x33] %v398
      %402 = vst.msk [vmem:[#allocation3 + $0x20] sm:$0x3] %vm279, %v393
      %v403 = vld [vmem:[%s246] sm:$0x3f]
      %v405 = vcombine.low %v403, %v403
      %v407 = vunpack.c.l.s4 1983009808
      %v408 = vunpack.c.0.s8 %v407
      %v409 = vlaneseq
      %v410 = vshrl.u32 %v409, 7
      %v411 = vsub.s32 %v408, %v410
      %v412 = vrot.slane %v405, %v411
      %v414 = vunpack.c.l.s4 1983009808
      %v415 = vunpack.c.0.s8 %v414
      %v416 = vlaneseq
      %v417 = vshrl.u32 %v416, 7
      %v418 = vsub.s32 %v415, %v417
      %v419 = vrot.slane %v403, %v418
      %420 = vrot.lane.b32.xlu0 %v412, 108
      %v421 = vpop.permute.xlu0 %420
      %422 = vrot.lane.b32.xlu0 %v419, 108
      %v423 = vpop.permute.xlu0 %422
      %v424 = vrot.slane %v421, 4
      %v425 = vrot.slane %v423, 4
      %v426 = vsel %vm304, %v424, %v425
      %vm427 = vcmask 883712
      %v428 = vsel %vm427, %v421, %v426
      %431 = vst [vmem:[#allocation3 + $0x18] sm:$0xcc] %v428
      %432 = vst.msk [vmem:[#allocation3 + $0x20] sm:$0xc] %vm311, %v423
      %v433 = vld [vmem:[%s246] sm:$0x3f]
      %v435 = vcombine.high %v433, %v433
      %v437 = vunpack.c.l.s4 1983009808
      %v438 = vunpack.c.0.s8 %v437
      %v439 = vlaneseq
      %v440 = vshrl.u32 %v439, 7
      %v441 = vsub.s32 %v438, %v440
      %v442 = vrot.slane %v433, %v441
      %v444 = vunpack.c.l.s4 1983009808
      %v445 = vunpack.c.0.s8 %v444
      %v446 = vlaneseq
      %v447 = vshrl.u32 %v446, 7
      %v448 = vsub.s32 %v445, %v447
      %v449 = vrot.slane %v435, %v448
      %450 = vrot.lane.b32.xlu0 %v442, 92
      %v451 = vpop.permute.xlu0 %450
      %452 = vrot.lane.b32.xlu0 %v449, 92
      %v453 = vpop.permute.xlu0 %452
      %v454 = vrot.slane %v451, 4
      %v455 = vrot.slane %v453, 4
      %v456 = vsel %vm304, %v454, %v455
      %vm457 = vcmask 752640
      %v458 = vsel %vm457, %v451, %v456
      %461 = vst [vmem:[#allocation3 + $0x24] sm:$0x33] %v458
      %462 = vst.msk [vmem:[#allocation3 + $0x2c] sm:$0x3] %vm279, %v453
      %v463 = vld [vmem:[%s246] sm:$0x3f]
      %v465 = vcombine.low %v463, %v463
      %v467 = vunpack.c.l.s4 1983009808
      %v468 = vunpack.c.0.s8 %v467
      %v469 = vlaneseq
      %v470 = vshrl.u32 %v469, 7
      %v471 = vsub.s32 %v468, %v470
      %v472 = vrot.slane %v465, %v471
      %v474 = vunpack.c.l.s4 1983009808
      %v475 = vunpack.c.0.s8 %v474
      %v476 = vlaneseq
      %v477 = vshrl.u32 %v476, 7
      %v478 = vsub.s32 %v475, %v477
      %v479 = vrot.slane %v463, %v478
      %480 = vrot.lane.b32.xlu0 %v472, 91
      %v481 = vpop.permute.xlu0 %480
      %482 = vrot.lane.b32.xlu0 %v479, 91
      %v483 = vpop.permute.xlu0 %482
      %v484 = vrot.slane %v481, 4
      %v485 = vrot.slane %v483, 4
      %v486 = vsel %vm304, %v484, %v485
      %vm487 = vcmask 744448
      %v488 = vsel %vm487, %v481, %v486
      %491 = vst [vmem:[#allocation3 + $0x24] sm:$0xcc] %v488
      %492 = vst.msk [vmem:[#allocation3 + $0x2c] sm:$0xc] %vm311, %v483
      %v493 = vld [vmem:[%s246] sm:$0x3f]
      %v495 = vcombine.high %v493, %v493
      %v497 = vunpack.c.l.s4 1983009808
      %v498 = vunpack.c.0.s8 %v497
      %v499 = vlaneseq
      %v500 = vshrl.u32 %v499, 7
      %v501 = vsub.s32 %v498, %v500
      %v502 = vrot.slane %v493, %v501
      %v504 = vunpack.c.l.s4 1983009808
      %v505 = vunpack.c.0.s8 %v504
      %v506 = vlaneseq
      %v507 = vshrl.u32 %v506, 7
      %v508 = vsub.s32 %v505, %v507
      %v509 = vrot.slane %v495, %v508
      %510 = vrot.lane.b32.xlu0 %v502, 90
      %v511 = vpop.permute.xlu0 %510
      %512 = vrot.lane.b32.xlu0 %v509, 90
      %v513 = vpop.permute.xlu0 %512
      %v514 = vrot.slane %v511, 4
      %v515 = vrot.slane %v513, 4
      %v516 = vsel %vm304, %v514, %v515
      %vm517 = vcmask 736256
      %v518 = vsel %vm517, %v511, %v516
      %521 = vst [vmem:[#allocation3 + $0x30] sm:$0x33] %v518
      %522 = vst.msk [vmem:[#allocation3 + $0x38] sm:$0x3] %vm279, %v513
      %v523 = vld [vmem:[%s1] sm:$0xf]
      %v524 = vld [vmem:[%s1 + $0x4] sm:$0xf]
      %v525 = vld [vmem:[#allocation3] sm:$0xff]
      %v526 = vld [vmem:[#allocation3 + $0x8] sm:$0xf]
      %v527 = vld [vmem:[#allocation3 + $0xc] sm:$0xff]
      %v528 = vld [vmem:[#allocation3 + $0x14] sm:$0xf]
      %v529 = vld [vmem:[#allocation3 + $0x18] sm:$0xff]
      %v530 = vld [vmem:[#allocation3 + $0x20] sm:$0xf]
      %v531 = vld [vmem:[#allocation3 + $0x24] sm:$0xff]
      %v532 = vld [vmem:[#allocation3 + $0x2c] sm:$0xf]
      %v533 = vld [vmem:[#allocation3 + $0x30] sm:$0x33]
      %v534 = vld [vmem:[#allocation3 + $0x38] sm:$0x3]
      %v535 = vld [vmem:[%s2] sm:$0xff]
      %v536 = vld [vmem:[%s2 + $0x8] sm:$0xff]
      %538 = vset.pattern.permute.xlu0 0
      %539 = vperm.xlu0 %538, %v535
      %v540 = vpop.permute.xlu0 %539
      %543 = vset.pattern.permute.xlu0 0
      %544 = vperm.xlu0 %543, %v536
      %v545 = vpop.permute.xlu0 %544
      %v549 = vunpack.c.l.b16 %v523
      %v550 = vunpack.c.l.b16 %v524
      %v551 = vpack.c.b16 %v550, %v549
      %v562 = vunpack.c.l.b16 %v525
      %v563 = vunpack.c.h.b16 %v525
      %v564 = vunpack.c.l.b16 %v526
      %v565 = vunpack.c.l.b16 %v527
      %v566 = vunpack.c.h.b16 %v527
      %v567 = vunpack.c.l.b16 %v528
      %v568 = vunpack.c.l.b16 %v529
      %v569 = vunpack.c.h.b16 %v529
      %v570 = vunpack.c.l.b16 %v530
      %v571 = vunpack.c.l.b16 %v531
      %v572 = vunpack.c.h.b16 %v531
      %v573 = vunpack.c.l.b16 %v532
      %v574 = vunpack.c.l.b16 %v533
      %v575 = vunpack.c.h.b16 %v533
      %v576 = vunpack.c.l.b16 %v534
      %v577 = vpack.c.b16 %v565, %v562
      %v578 = vpack.c.b16 %v566, %v563
      %v579 = vpack.c.b16 %v567, %v564
      %v580 = vpack.c.b16 %v571, %v568
      %v581 = vpack.c.b16 %v572, %v569
      %v582 = vpack.c.b16 %v573, %v570
      %v583 = vpack.c.b16 %v574, %v574
      %v584 = vpack.c.b16 %v575, %v575
      %v585 = vpack.c.b16 %v576, %v576
      %vm592 = vcmask 293888
      %v594 = vsel %vm592, %v551, 0
      %vm596 = vcmask 1041408
      %v598 = vsel %vm596, %v583, 0
      %v601 = vsel %vm596, %v584, 0
      %v604 = vsel %vm596, %v585, 0
      %606 = vmatprep.subr.bf16.mxu0 0
      %607 = vmatpush1.bf16.msra.mxu0 0
      %608 = vmatprep.subr.bf16.mxu0 0
      %609 = vmatpush1.bf16.msra.mxu0 0
      %610 = vmatprep.subr.bf16.mxu0 0
      %611 = vmatpush1.bf16.msra.mxu0 0
      %612 = vmatprep.subr.bf16.mxu0 0
      %613 = vmatpush1.bf16.msra.mxu0 0
      %614 = vmatprep.subr.bf16.mxu0 0
      %615 = vmatpush1.bf16.msra.mxu0 0
      %616 = vmatprep.subr.bf16.mxu0 %v601
      %617 = vmatpush1.bf16.msra.mxu0 %v598
      %618 = vmatprep.subr.bf16.mxu0 %v581
      %619 = vmatpush1.bf16.msra.mxu0 %v580
      %620 = vmatprep.subr.bf16.mxu0 %v578
      %621 = vmatpush1.bf16.msra.mxu0 %v577
      %622 = vmatprep.subr.bf16.mxu0 0
      %623 = vmatpush2.bf16.msra.mxu0 0
      %624 = vmatprep.subr.bf16.mxu0 0
      %625 = vmatpush2.bf16.msra.mxu0 0
      %626 = vmatprep.subr.bf16.mxu0 0
      %627 = vmatpush2.bf16.msra.mxu0 0
      %628 = vmatprep.subr.bf16.mxu0 0
      %629 = vmatpush2.bf16.msra.mxu0 0
      %630 = vmatprep.subr.bf16.mxu0 0
      %631 = vmatpush2.bf16.msra.mxu0 0
      %632 = vmatprep.subr.bf16.mxu0 0
      %633 = vmatpush2.bf16.msra.mxu0 0
      %634 = vmatprep.subr.bf16.mxu0 0
      %635 = vmatpush2.bf16.msra.mxu0 0
      %636 = vmatprep.subr.bf16.mxu0 0
      %637 = vmatpush2.bf16.msra.mxu0 0
      %638 = vmatprep.mubr.bf16.mxu0 0
      %639 = vmatmul.mubr.bf16.gmra.mxu0 %v594
      %v640 = vpop.f32.mrf.mxu0
      %v641 = vadd.f32 %v540, %v640
      %v642 = vpop.f32.mrf.mxu0
      %v643 = vadd.f32 %v540, %v642
      %v644 = vpop.f32.mrf.mxu0
      %v645 = vadd.f32 %v545, %v644
      %v646 = vpop.f32.mrf.mxu0
      %v647 = vadd.f32 %v545, %v646
      %648 = vdwg.mxu0
      %649 = vmatprep.subr.bf16.mxu0 0
      %650 = vmatpush1.bf16.msra.mxu0 0
      %651 = vmatprep.subr.bf16.mxu0 0
      %652 = vmatpush1.bf16.msra.mxu0 0
      %653 = vmatprep.subr.bf16.mxu0 0
      %654 = vmatpush1.bf16.msra.mxu0 0
      %655 = vmatprep.subr.bf16.mxu0 0
      %656 = vmatpush1.bf16.msra.mxu0 0
      %657 = vmatprep.subr.bf16.mxu0 0
      %658 = vmatpush1.bf16.msra.mxu0 0
      %659 = vmatprep.subr.bf16.mxu0 0
      %660 = vmatpush1.bf16.msra.mxu0 %v604
      %661 = vmatprep.subr.bf16.mxu0 0
      %662 = vmatpush1.bf16.msra.mxu0 %v582
      %663 = vmatprep.subr.bf16.mxu0 0
      %664 = vmatpush1.bf16.msra.mxu0 %v579
      %665 = vmatprep.subr.bf16.mxu0 0
      %666 = vmatpush2.bf16.msra.mxu0 0
      %667 = vmatprep.subr.bf16.mxu0 0
      %668 = vmatpush2.bf16.msra.mxu0 0
      %669 = vmatprep.subr.bf16.mxu0 0
      %670 = vmatpush2.bf16.msra.mxu0 0
      %671 = vmatprep.subr.bf16.mxu0 0
      %672 = vmatpush2.bf16.msra.mxu0 0
      %673 = vmatprep.subr.bf16.mxu0 0
      %674 = vmatpush2.bf16.msra.mxu0 0
      %675 = vmatprep.subr.bf16.mxu0 0
      %676 = vmatpush2.bf16.msra.mxu0 0
      %677 = vmatprep.subr.bf16.mxu0 0
      %678 = vmatpush2.bf16.msra.mxu0 0
      %679 = vmatprep.subr.bf16.mxu0 0
      %680 = vmatpush2.bf16.msra.mxu0 0
      %681 = vmatprep.mubr.bf16.mxu0 0
      %682 = vmatmul.mubr.bf16.gmra.mxu0 %v594
      %v683 = vpop.f32.mrf.mxu0
      %v684 = vadd.f32 %v540, %v683
      %v685 = vpop.f32.mrf.mxu0
      %v686 = vpop.f32.mrf.mxu0
      %v687 = vadd.f32 %v545, %v686
      %v688 = vpop.f32.mrf.mxu0
      %689 = vdwg.mxu0
      %v690 = vmax.f32 %v641, 0.0
      %v691 = vmax.f32 %v643, 0.0
      %v692 = vmax.f32 %v684, 0.0
      %v693 = vmax.f32 %v645, 0.0
      %v694 = vmax.f32 %v647, 0.0
      %v695 = vmax.f32 %v687, 0.0
      %v696 = vld [vmem:[%s5] sm:$0x7]
      %v698 = vlaneseq
      %v699 = vshrl.u32 %v698, 7
      %v700 = vsub.s32 0, %v699
      %v701 = vrot.slane %v696, %v700
      %v702 = vlaneseq
      %v703 = vshrl.u32 %v702, 7
      %v704 = vsub.s32 1, %v703
      %v705 = vrot.slane %v696, %v704
      %v706 = vlaneseq
      %v707 = vshrl.u32 %v706, 7
      %v708 = vsub.s32 2, %v707
      %v709 = vrot.slane %v696, %v708
      %v713 = vmul.f32 %v690, %v701
      %v714 = vmul.f32 %v691, %v705
      %v715 = vmul.f32 %v692, %v709
      %v716 = vmul.f32 %v693, %v701
      %v717 = vmul.f32 %v694, %v705
      %v718 = vmul.f32 %v695, %v709
      %v719 = vpack.c.bf16 %v716, %v713
      %v720 = vpack.c.bf16 %v717, %v714
      %v721 = vpack.c.bf16 %v718, %v715
      %v725 = vunpack.c.l.b16 %v719
      %v726 = vunpack.c.l.b16 %v720
      %v727 = vunpack.c.l.b16 %v721
      %v728 = vunpack.c.h.b16 %v719
      %v729 = vunpack.c.h.b16 %v720
      %v730 = vunpack.c.h.b16 %v721
      %v731 = vpack.c.b16 %v726, %v725
      %v732 = vpack.c.b16 %v727, %v727
      %v733 = vpack.c.b16 %v729, %v728
      %v734 = vpack.c.b16 %v730, %v730
      %739 = vst [vmem:[#allocation2 + $0x4] sm:$0xff] %v731
      %vm740 = vcmask 240640
      %741 = vst.msk [vmem:[#allocation2 + $0xc] sm:$0xf] %vm740, %v732
      %742 = vst [vmem:[#allocation2 + $0x14] sm:$0xff] %v733
      %743 = vst.msk [vmem:[#allocation2 + $0x1c] sm:$0xf] %vm740, %v734
      %v744 = vld [vmem:[#allocation2] sm:$0xff]
      %v745 = vld [vmem:[#allocation2 + $0x8] sm:$0xff]
      %v746 = vld [vmem:[#allocation2 + $0x10] sm:$0xff]
      %v747 = vld [vmem:[#allocation2 + $0x18] sm:$0xff]
      %752 = vrot.lane.b32.xlu0 %v744, 19
      %v753 = vpop.permute.xlu0 %752
      %754 = vrot.lane.b32.xlu0 %v745, 19
      %v755 = vpop.permute.xlu0 %754
      %756 = vrot.lane.b32.xlu0 %v746, 19
      %v757 = vpop.permute.xlu0 %756
      %758 = vrot.lane.b32.xlu0 %v747, 19
      %v759 = vpop.permute.xlu0 %758
      %v760 = vrot.slane %v753, 4
      %v761 = vrot.slane %v755, 4
      %v762 = vrot.slane %v757, 4
      %v763 = vrot.slane %v759, 4
      %v764 = vsel %vm304, %v760, %v761
      %vm765 = vcmask 154624
      %v766 = vsel %vm765, %v753, %v764
      %v767 = vsel %vm765, %v755, %v761
      %v768 = vsel %vm304, %v762, %v763
      %v769 = vsel %vm765, %v757, %v768
      %v770 = vsel %vm765, %v759, %v763
      %775 = vst [vmem:[#allocation4] sm:$0xff] %v766
      %vm776 = vcmask 257024
      %777 = vst.msk [vmem:[#allocation4 + $0x8] sm:$0xf] %vm776, %v767
      %778 = vst [vmem:[#allocation4 + $0xc] sm:$0xff] %v769
      %779 = vst.msk [vmem:[#allocation4 + $0x14] sm:$0xf] %vm776, %v770
      %v780 = vld [vmem:[#allocation2] sm:$0xff]
      %v781 = vld [vmem:[#allocation2 + $0x8] sm:$0xff]
      %v782 = vld [vmem:[#allocation2 + $0x10] sm:$0xff]
      %v783 = vld [vmem:[#allocation2 + $0x18] sm:$0xff]
      %788 = vrot.lane.b32.xlu0 %v780, 18
      %v789 = vpop.permute.xlu0 %788
      %790 = vrot.lane.b32.xlu0 %v781, 18
      %v791 = vpop.permute.xlu0 %790
      %792 = vrot.lane.b32.xlu0 %v782, 18
      %v793 = vpop.permute.xlu0 %792
      %794 = vrot.lane.b32.xlu0 %v783, 18
      %v795 = vpop.permute.xlu0 %794
      %v796 = vrot.slane %v789, 4
      %v797 = vrot.slane %v791, 4
      %v798 = vrot.slane %v793, 4
      %v799 = vrot.slane %v795, 4
      %v800 = vsel %vm304, %v796, %v797
      %vm801 = vcmask 146432
      %v802 = vsel %vm801, %v789, %v800
      %v803 = vsel %vm801, %v791, %v797
      %v804 = vsel %vm304, %v798, %v799
      %v805 = vsel %vm801, %v793, %v804
      %v806 = vsel %vm801, %v795, %v799
      %811 = vst [vmem:[#allocation4 + $0x18] sm:$0xff] %v802
      %812 = vst.msk [vmem:[#allocation4 + $0x20] sm:$0xf] %vm776, %v803
      %813 = vst [vmem:[#allocation4 + $0x24] sm:$0xff] %v805
      %814 = vst.msk [vmem:[#allocation4 + $0x2c] sm:$0xf] %vm776, %v806
      %v815 = vld [vmem:[#allocation2] sm:$0xff]
      %v816 = vld [vmem:[#allocation2 + $0x8] sm:$0xff]
      %v817 = vld [vmem:[#allocation2 + $0x10] sm:$0xff]
      %v818 = vld [vmem:[#allocation2 + $0x18] sm:$0xff]
      %823 = vrot.lane.b32.xlu0 %v815, 17
      %v824 = vpop.permute.xlu0 %823
      %825 = vrot.lane.b32.xlu0 %v816, 17
      %v826 = vpop.permute.xlu0 %825
      %827 = vrot.lane.b32.xlu0 %v817, 17
      %v828 = vpop.permute.xlu0 %827
      %829 = vrot.lane.b32.xlu0 %v818, 17
      %v830 = vpop.permute.xlu0 %829
      %v831 = vrot.slane %v824, 4
      %v832 = vrot.slane %v826, 4
      %v833 = vrot.slane %v828, 4
      %v834 = vrot.slane %v830, 4
      %v835 = vsel %vm304, %v831, %v832
      %vm836 = vcmask 138240
      %v837 = vsel %vm836, %v824, %v835
      %v838 = vsel %vm836, %v826, %v832
      %v839 = vsel %vm304, %v833, %v834
      %v840 = vsel %vm836, %v828, %v839
      %v841 = vsel %vm836, %v830, %v834
      %846 = vst [vmem:[#allocation4 + $0x30] sm:$0xff] %v837
      %847 = vst.msk [vmem:[#allocation4 + $0x38] sm:$0xf] %vm776, %v838
      %848 = vst [vmem:[#allocation4 + $0x3c] sm:$0xff] %v840
      %849 = vst.msk [vmem:[#allocation4 + $0x44] sm:$0xf] %vm776, %v841
      %v850 = vld [vmem:[#allocation2] sm:$0xff]
      %v851 = vld [vmem:[#allocation2 + $0x8] sm:$0xff]
      %v852 = vld [vmem:[#allocation2 + $0x10] sm:$0xff]
      %v853 = vld [vmem:[#allocation2 + $0x18] sm:$0xff]
      %858 = vrot.lane.b32.xlu0 %v850, 1
      %v859 = vpop.permute.xlu0 %858
      %860 = vrot.lane.b32.xlu0 %v851, 1
      %v861 = vpop.permute.xlu0 %860
      %862 = vrot.lane.b32.xlu0 %v852, 1
      %v863 = vpop.permute.xlu0 %862
      %864 = vrot.lane.b32.xlu0 %v853, 1
      %v865 = vpop.permute.xlu0 %864
      %v866 = vrot.slane %v859, 4
      %v867 = vrot.slane %v861, 4
      %v868 = vrot.slane %v863, 4
      %v869 = vrot.slane %v865, 4
      %v870 = vsel %vm304, %v866, %v867
      %vm871 = vcmask 7168
      %v872 = vsel %vm871, %v859, %v870
      %v873 = vsel %vm871, %v861, %v867
      %v874 = vsel %vm304, %v868, %v869
      %v875 = vsel %vm871, %v863, %v874
      %v876 = vsel %vm871, %v865, %v869
      %881 = vst [vmem:[#allocation4 + $0x48] sm:$0xff] %v872
      %882 = vst.msk [vmem:[#allocation4 + $0x50] sm:$0xf] %vm776, %v873
      %883 = vst [vmem:[#allocation4 + $0x54] sm:$0xff] %v875
      %884 = vst.msk [vmem:[#allocation4 + $0x5c] sm:$0xf] %vm776, %v876
      %v885 = vld [vmem:[#allocation2 + $0x4] sm:$0xff]
      %v886 = vld [vmem:[#allocation2 + $0xc] sm:$0xf]
      %v887 = vld [vmem:[#allocation2 + $0x14] sm:$0xff]
      %v888 = vld [vmem:[#allocation2 + $0x1c] sm:$0xf]
      %889 = vst [vmem:[#allocation4 + $0x60] sm:$0xff] %v885
      %890 = vst.msk [vmem:[#allocation4 + $0x68] sm:$0xf] %vm776, %v886
      %891 = vst [vmem:[#allocation4 + $0x6c] sm:$0xff] %v887
      %892 = vst.msk [vmem:[#allocation4 + $0x74] sm:$0xf] %vm776, %v888
      %v893 = vld [vmem:[#allocation2 + $0x4] sm:$0xff]
      %v894 = vld [vmem:[#allocation2 + $0xc] sm:$0xf]
      %v895 = vld [vmem:[#allocation2 + $0x14] sm:$0xff]
      %v896 = vld [vmem:[#allocation2 + $0x1c] sm:$0xf]
      %901 = vrot.lane.b32.xlu0 %v893, 127
      %v902 = vpop.permute.xlu0 %901
      %903 = vrot.lane.b32.xlu0 %v894, 127
      %v904 = vpop.permute.xlu0 %903
      %905 = vrot.lane.b32.xlu0 %v895, 127
      %v906 = vpop.permute.xlu0 %905
      %907 = vrot.lane.b32.xlu0 %v896, 127
      %v908 = vpop.permute.xlu0 %907
      %v909 = vrot.slane %v902, 4
      %v910 = vrot.slane %v904, 4
      %v911 = vrot.slane %v906, 4
      %v912 = vrot.slane %v908, 4
      %v913 = vsel %vm304, %v909, %v910
      %v914 = vsel %vm306, %v902, %v913
      %v915 = vsel %vm304, %v911, %v912
      %v916 = vsel %vm306, %v906, %v915
      %921 = vst [vmem:[#allocation4 + $0x78] sm:$0xff] %v914
      %922 = vst.msk [vmem:[#allocation4 + $0x80] sm:$0xf] %vm776, %v904
      %923 = vst [vmem:[#allocation4 + $0x84] sm:$0xff] %v916
      %924 = vst.msk [vmem:[#allocation4 + $0x8c] sm:$0xf] %vm776, %v908
      %v925 = vld [vmem:[#allocation2 + $0x4] sm:$0xff]
      %v926 = vld [vmem:[#allocation2 + $0xc] sm:$0xf]
      %v927 = vld [vmem:[#allocation2 + $0x14] sm:$0xff]
      %v928 = vld [vmem:[#allocation2 + $0x1c] sm:$0xf]
      %933 = vrot.lane.b32.xlu0 %v925, 111
      %v934 = vpop.permute.xlu0 %933
      %935 = vrot.lane.b32.xlu0 %v926, 111
      %v936 = vpop.permute.xlu0 %935
      %937 = vrot.lane.b32.xlu0 %v927, 111
      %v938 = vpop.permute.xlu0 %937
      %939 = vrot.lane.b32.xlu0 %v928, 111
      %v940 = vpop.permute.xlu0 %939
      %v941 = vrot.slane %v934, 4
      %v942 = vrot.slane %v936, 4
      %v943 = vrot.slane %v938, 4
      %v944 = vrot.slane %v940, 4
      %v945 = vsel %vm304, %v941, %v942
      %vm946 = vcmask 908288
      %v947 = vsel %vm946, %v934, %v945
      %v948 = vsel %vm304, %v943, %v944
      %v949 = vsel %vm946, %v938, %v948
      %954 = vst [vmem:[#allocation4 + $0x90] sm:$0xff] %v947
      %955 = vst.msk [vmem:[#allocation4 + $0x98] sm:$0xf] %vm776, %v936
      %956 = vst [vmem:[#allocation4 + $0x9c] sm:$0xff] %v949
      %957 = vst.msk [vmem:[#allocation4 + $0xa4] sm:$0xf] %vm776, %v940
      %v958 = vld [vmem:[#allocation2 + $0x4] sm:$0xff]
      %v959 = vld [vmem:[#allocation2 + $0xc] sm:$0xf]
      %v960 = vld [vmem:[#allocation2 + $0x14] sm:$0xff]
      %v961 = vld [vmem:[#allocation2 + $0x1c] sm:$0xf]
      %966 = vrot.lane.b32.xlu0 %v958, 110
      %v967 = vpop.permute.xlu0 %966
      %968 = vrot.lane.b32.xlu0 %v959, 110
      %v969 = vpop.permute.xlu0 %968
      %970 = vrot.lane.b32.xlu0 %v960, 110
      %v971 = vpop.permute.xlu0 %970
      %972 = vrot.lane.b32.xlu0 %v961, 110
      %v973 = vpop.permute.xlu0 %972
      %v974 = vrot.slane %v967, 4
      %v975 = vrot.slane %v969, 4
      %v976 = vrot.slane %v971, 4
      %v977 = vrot.slane %v973, 4
      %v978 = vsel %vm304, %v974, %v975
      %v979 = vsel %vm367, %v967, %v978
      %v980 = vsel %vm304, %v976, %v977
      %v981 = vsel %vm367, %v971, %v980
      %986 = vst [vmem:[#allocation4 + $0xa8] sm:$0xff] %v979
      %987 = vst.msk [vmem:[#allocation4 + $0xb0] sm:$0xf] %vm776, %v969
      %988 = vst [vmem:[#allocation4 + $0xb4] sm:$0xff] %v981
      %989 = vst.msk [vmem:[#allocation4 + $0xbc] sm:$0xf] %vm776, %v973
      %v990 = vld [vmem:[#allocation2 + $0x4] sm:$0xff]
      %v991 = vld [vmem:[#allocation2 + $0xc] sm:$0xf]
      %v992 = vld [vmem:[#allocation2 + $0x14] sm:$0xff]
      %v993 = vld [vmem:[#allocation2 + $0x1c] sm:$0xf]
      %998 = vrot.lane.b32.xlu0 %v990, 109
      %v999 = vpop.permute.xlu0 %998
      %1000 = vrot.lane.b32.xlu0 %v991, 109
      %v1001 = vpop.permute.xlu0 %1000
      %1002 = vrot.lane.b32.xlu0 %v992, 109
      %v1003 = vpop.permute.xlu0 %1002
      %1004 = vrot.lane.b32.xlu0 %v993, 109
      %v1005 = vpop.permute.xlu0 %1004
      %v1006 = vrot.slane %v999, 4
      %v1007 = vrot.slane %v1001, 4
      %v1008 = vrot.slane %v1003, 4
      %v1009 = vrot.slane %v1005, 4
      %v1010 = vsel %vm304, %v1006, %v1007
      %v1011 = vsel %vm397, %v999, %v1010
      %v1012 = vsel %vm304, %v1008, %v1009
      %v1013 = vsel %vm397, %v1003, %v1012
      %1018 = vst [vmem:[#allocation4 + $0xc0] sm:$0xff] %v1011
      %1019 = vst.msk [vmem:[#allocation4 + $0xc8] sm:$0xf] %vm776, %v1001
      %1020 = vst [vmem:[#allocation4 + $0xcc] sm:$0xff] %v1013
      %1021 = vst.msk [vmem:[#allocation4 + $0xd4] sm:$0xf] %vm776, %v1005
      %v1022 = vld [vmem:[%s3] sm:$0xff]
      %v1023 = vld [vmem:[%s3 + $0x8] sm:$0xff]
      %v1024 = vld [vmem:[%s3 + $0x10] sm:$0xff]
      %v1025 = vld [vmem:[%s3 + $0x18] sm:$0xff]
      %v1026 = vld [vmem:[#allocation4] sm:$0xff]
      %v1027 = vld [vmem:[#allocation4 + $0x8] sm:$0xf]
      %v1028 = vld [vmem:[#allocation4 + $0xc] sm:$0xff]
      %v1029 = vld [vmem:[#allocation4 + $0x14] sm:$0xf]
      %v1030 = vld [vmem:[#allocation4 + $0x18] sm:$0xff]
      %v1031 = vld [vmem:[#allocation4 + $0x20] sm:$0xf]
      %v1032 = vld [vmem:[#allocation4 + $0x24] sm:$0xff]
      %v1033 = vld [vmem:[#allocation4 + $0x2c] sm:$0xf]
      %v1034 = vld [vmem:[#allocation4 + $0x30] sm:$0xff]
      %v1035 = vld [vmem:[#allocation4 + $0x38] sm:$0xf]
      %v1036 = vld [vmem:[#allocation4 + $0x3c] sm:$0xff]
      %v1037 = vld [vmem:[#allocation4 + $0x44] sm:$0xf]
      %v1038 = vld [vmem:[#allocation4 + $0x48] sm:$0xff]
      %v1039 = vld [vmem:[#allocation4 + $0x50] sm:$0xf]
      %v1040 = vld [vmem:[#allocation4 + $0x54] sm:$0xff]
      %v1041 = vld [vmem:[#allocation4 + $0x5c] sm:$0xf]
      %v1042 = vld [vmem:[#allocation4 + $0x60] sm:$0xff]
      %v1043 = vld [vmem:[#allocation4 + $0x68] sm:$0xf]
      %v1044 = vld [vmem:[#allocation4 + $0x6c] sm:$0xff]
      %v1045 = vld [vmem:[#allocation4 + $0x74] sm:$0xf]
      %v1046 = vld [vmem:[#allocation4 + $0x78] sm:$0xff]
      %v1047 = vld [vmem:[#allocation4 + $0x80] sm:$0xf]
      %v1048 = vld [vmem:[#allocation4 + $0x84] sm:$0xff]
      %v1049 = vld [vmem:[#allocation4 + $0x8c] sm:$0xf]
      %v1050 = vld [vmem:[#allocation4 + $0x90] sm:$0xff]
      %v1051 = vld [vmem:[#allocation4 + $0x98] sm:$0xf]
      %v1052 = vld [vmem:[#allocation4 + $0x9c] sm:$0xff]
      %v1053 = vld [vmem:[#allocation4 + $0xa4] sm:$0xf]
      %v1054 = vld [vmem:[#allocation4 + $0xa8] sm:$0xff]
      %v1055 = vld [vmem:[#allocation4 + $0xb0] sm:$0xf]
      %v1056 = vld [vmem:[#allocation4 + $0xb4] sm:$0xff]
      %v1057 = vld [vmem:[#allocation4 + $0xbc] sm:$0xf]
      %v1058 = vld [vmem:[#allocation4 + $0xc0] sm:$0xff]
      %v1059 = vld [vmem:[#allocation4 + $0xc8] sm:$0xf]
      %v1060 = vld [vmem:[#allocation4 + $0xcc] sm:$0xff]
      %v1061 = vld [vmem:[#allocation4 + $0xd4] sm:$0xf]
      %v1062 = vld [vmem:[%s4] sm:$0xff]
      %v1063 = vld [vmem:[%s4 + $0x8] sm:$0xff]
      %v1064 = vld [vmem:[%s4 + $0x10] sm:$0xff]
      %v1065 = vld [vmem:[%s4 + $0x18] sm:$0xff]
      %1067 = vset.pattern.permute.xlu0 0
      %1068 = vperm.xlu0 %1067, %v1062
      %v1069 = vpop.permute.xlu0 %1068
      %1072 = vset.pattern.permute.xlu0 0
      %1073 = vperm.xlu0 %1072, %v1063
      %v1074 = vpop.permute.xlu0 %1073
      %1077 = vset.pattern.permute.xlu0 0
      %1078 = vperm.xlu0 %1077, %v1064
      %v1079 = vpop.permute.xlu0 %1078
      %1082 = vset.pattern.permute.xlu0 0
      %1083 = vperm.xlu0 %1082, %v1065
      %v1084 = vpop.permute.xlu0 %1083
      %v1090 = vunpack.c.l.b16 %v1022
      %v1091 = vunpack.c.h.b16 %v1022
      %v1092 = vunpack.c.l.b16 %v1023
      %v1093 = vunpack.c.h.b16 %v1023
      %v1094 = vunpack.c.l.b16 %v1024
      %v1095 = vunpack.c.h.b16 %v1024
      %v1096 = vunpack.c.l.b16 %v1025
      %v1097 = vunpack.c.h.b16 %v1025
      %v1098 = vpack.c.b16 %v1092, %v1090
      %v1099 = vpack.c.b16 %v1093, %v1091
      %v1100 = vpack.c.b16 %v1096, %v1094
      %v1101 = vpack.c.b16 %v1097, %v1095
      %v1140 = vunpack.c.l.b16 %v1026
      %v1141 = vunpack.c.h.b16 %v1026
      %v1142 = vunpack.c.l.b16 %v1027
      %v1143 = vunpack.c.l.b16 %v1028
      %v1144 = vunpack.c.h.b16 %v1028
      %v1145 = vunpack.c.l.b16 %v1029
      %v1146 = vunpack.c.l.b16 %v1030
      %v1147 = vunpack.c.h.b16 %v1030
      %v1148 = vunpack.c.l.b16 %v1031
      %v1149 = vunpack.c.l.b16 %v1032
      %v1150 = vunpack.c.h.b16 %v1032
      %v1151 = vunpack.c.l.b16 %v1033
      %v1152 = vunpack.c.l.b16 %v1034
      %v1153 = vunpack.c.h.b16 %v1034
      %v1154 = vunpack.c.l.b16 %v1035
      %v1155 = vunpack.c.l.b16 %v1036
      %v1156 = vunpack.c.h.b16 %v1036
      %v1157 = vunpack.c.l.b16 %v1037
      %v1158 = vunpack.c.l.b16 %v1038
      %v1159 = vunpack.c.h.b16 %v1038
      %v1160 = vunpack.c.l.b16 %v1039
      %v1161 = vunpack.c.l.b16 %v1040
      %v1162 = vunpack.c.h.b16 %v1040
      %v1163 = vunpack.c.l.b16 %v1041
      %v1164 = vunpack.c.l.b16 %v1042
      %v1165 = vunpack.c.h.b16 %v1042
      %v1166 = vunpack.c.l.b16 %v1043
      %v1167 = vunpack.c.l.b16 %v1044
      %v1168 = vunpack.c.h.b16 %v1044
      %v1169 = vunpack.c.l.b16 %v1045
      %v1170 = vunpack.c.l.b16 %v1046
      %v1171 = vunpack.c.h.b16 %v1046
      %v1172 = vunpack.c.l.b16 %v1047
      %v1173 = vunpack.c.l.b16 %v1048
      %v1174 = vunpack.c.h.b16 %v1048
      %v1175 = vunpack.c.l.b16 %v1049
      %v1176 = vunpack.c.l.b16 %v1050
      %v1177 = vunpack.c.h.b16 %v1050
      %v1178 = vunpack.c.l.b16 %v1051
      %v1179 = vunpack.c.l.b16 %v1052
      %v1180 = vunpack.c.h.b16 %v1052
      %v1181 = vunpack.c.l.b16 %v1053
      %v1182 = vunpack.c.l.b16 %v1054
      %v1183 = vunpack.c.h.b16 %v1054
      %v1184 = vunpack.c.l.b16 %v1055
      %v1185 = vunpack.c.l.b16 %v1056
      %v1186 = vunpack.c.h.b16 %v1056
      %v1187 = vunpack.c.l.b16 %v1057
      %v1188 = vunpack.c.l.b16 %v1058
      %v1189 = vunpack.c.h.b16 %v1058
      %v1190 = vunpack.c.l.b16 %v1059
      %v1191 = vunpack.c.l.b16 %v1060
      %v1192 = vunpack.c.h.b16 %v1060
      %v1193 = vunpack.c.l.b16 %v1061
      %v1194 = vpack.c.b16 %v1143, %v1140
      %v1195 = vpack.c.b16 %v1144, %v1141
      %v1196 = vpack.c.b16 %v1145, %v1142
      %v1197 = vpack.c.b16 %v1149, %v1146
      %v1198 = vpack.c.b16 %v1150, %v1147
      %v1199 = vpack.c.b16 %v1151, %v1148
      %v1200 = vpack.c.b16 %v1155, %v1152
      %v1201 = vpack.c.b16 %v1156, %v1153
      %v1202 = vpack.c.b16 %v1157, %v1154
      %v1203 = vpack.c.b16 %v1161, %v1158
      %v1204 = vpack.c.b16 %v1162, %v1159
      %v1205 = vpack.c.b16 %v1163, %v1160
      %v1206 = vpack.c.b16 %v1167, %v1164
      %v1207 = vpack.c.b16 %v1168, %v1165
      %v1208 = vpack.c.b16 %v1169, %v1166
      %v1209 = vpack.c.b16 %v1173, %v1170
      %v1210 = vpack.c.b16 %v1174, %v1171
      %v1211 = vpack.c.b16 %v1175, %v1172
      %v1212 = vpack.c.b16 %v1179, %v1176
      %v1213 = vpack.c.b16 %v1180, %v1177
      %v1214 = vpack.c.b16 %v1181, %v1178
      %v1215 = vpack.c.b16 %v1185, %v1182
      %v1216 = vpack.c.b16 %v1186, %v1183
      %v1217 = vpack.c.b16 %v1187, %v1184
      %v1218 = vpack.c.b16 %v1191, %v1188
      %v1219 = vpack.c.b16 %v1192, %v1189
      %v1220 = vpack.c.b16 %v1193, %v1190
      %vm1248 = vcmask 130048
      %v1250 = vsel %vm1248, %v1099, 0
      %v1253 = vsel %vm1248, %v1101, 0
      %1255 = vmatprep.subr.bf16.mxu0 %v1216
      %1256 = vmatpush1.bf16.msra.mxu0 %v1215
      %1257 = vmatprep.subr.bf16.mxu0 %v1213
      %1258 = vmatpush1.bf16.msra.mxu0 %v1212
      %1259 = vmatprep.subr.bf16.mxu0 %v1210
      %1260 = vmatpush1.bf16.msra.mxu0 %v1209
      %1261 = vmatprep.subr.bf16.mxu0 %v1207
      %1262 = vmatpush1.bf16.msra.mxu0 %v1206
      %1263 = vmatprep.subr.bf16.mxu0 %v1204
      %1264 = vmatpush1.bf16.msra.mxu0 %v1203
      %1265 = vmatprep.subr.bf16.mxu0 %v1201
      %1266 = vmatpush1.bf16.msra.mxu0 %v1200
      %1267 = vmatprep.subr.bf16.mxu0 %v1198
      %1268 = vmatpush1.bf16.msra.mxu0 %v1197
      %1269 = vmatprep.subr.bf16.mxu0 %v1195
      %1270 = vmatpush1.bf16.msra.mxu0 %v1194
      %1271 = vmatprep.subr.bf16.mxu0 0
      %1272 = vmatpush2.bf16.msra.mxu0 0
      %1273 = vmatprep.subr.bf16.mxu0 0
      %1274 = vmatpush2.bf16.msra.mxu0 0
      %1275 = vmatprep.subr.bf16.mxu0 0
      %1276 = vmatpush2.bf16.msra.mxu0 0
      %1277 = vmatprep.subr.bf16.mxu0 0
      %1278 = vmatpush2.bf16.msra.mxu0 0
      %1279 = vmatprep.subr.bf16.mxu0 0
      %1280 = vmatpush2.bf16.msra.mxu0 0
      %1281 = vmatprep.subr.bf16.mxu0 0
      %1282 = vmatpush2.bf16.msra.mxu0 0
      %1283 = vmatprep.subr.bf16.mxu0 0
      %1284 = vmatpush2.bf16.msra.mxu0 0
      %1285 = vmatprep.subr.bf16.mxu0 %v1219
      %1286 = vmatpush2.bf16.msra.mxu0 %v1218
      %1287 = vmatprep.mubr.bf16.mxu0 %v1250
      %1288 = vmatmul.mubr.bf16.gmra.mxu0 %v1098
      %v1289 = vpop.f32.mrf.mxu0
      %v1290 = vadd.f32 %v1069, %v1289
      %v1291 = vpop.f32.mrf.mxu0
      %v1292 = vadd.f32 %v1069, %v1291
      %v1293 = vpop.f32.mrf.mxu0
      %v1294 = vadd.f32 %v1074, %v1293
      %v1295 = vpop.f32.mrf.mxu0
      %v1296 = vadd.f32 %v1074, %v1295
      %1297 = vmatprep.mubr.bf16.mxu0 %v1253
      %1298 = vmatmul.mubr.bf16.gmra.mxu0 %v1100
      %v1299 = vpop.f32.mrf.mxu0
      %v1300 = vadd.f32 %v1079, %v1299
      %v1301 = vpop.f32.mrf.mxu0
      %v1302 = vadd.f32 %v1079, %v1301
      %v1303 = vpop.f32.mrf.mxu0
      %v1304 = vadd.f32 %v1084, %v1303
      %v1305 = vpop.f32.mrf.mxu0
      %v1306 = vadd.f32 %v1084, %v1305
      %1307 = vdwg.mxu0
      %1308 = vmatprep.subr.bf16.mxu0 0
      %1309 = vmatpush1.bf16.msra.mxu0 %v1217
      %1310 = vmatprep.subr.bf16.mxu0 0
      %1311 = vmatpush1.bf16.msra.mxu0 %v1214
      %1312 = vmatprep.subr.bf16.mxu0 0
      %1313 = vmatpush1.bf16.msra.mxu0 %v1211
      %1314 = vmatprep.subr.bf16.mxu0 0
      %1315 = vmatpush1.bf16.msra.mxu0 %v1208
      %1316 = vmatprep.subr.bf16.mxu0 0
      %1317 = vmatpush1.bf16.msra.mxu0 %v1205
      %1318 = vmatprep.subr.bf16.mxu0 0
      %1319 = vmatpush1.bf16.msra.mxu0 %v1202
      %1320 = vmatprep.subr.bf16.mxu0 0
      %1321 = vmatpush1.bf16.msra.mxu0 %v1199
      %1322 = vmatprep.subr.bf16.mxu0 0
      %1323 = vmatpush1.bf16.msra.mxu0 %v1196
      %1324 = vmatprep.subr.bf16.mxu0 0
      %1325 = vmatpush2.bf16.msra.mxu0 0
      %1326 = vmatprep.subr.bf16.mxu0 0
      %1327 = vmatpush2.bf16.msra.mxu0 0
      %1328 = vmatprep.subr.bf16.mxu0 0
      %1329 = vmatpush2.bf16.msra.mxu0 0
      %1330 = vmatprep.subr.bf16.mxu0 0
      %1331 = vmatpush2.bf16.msra.mxu0 0
      %1332 = vmatprep.subr.bf16.mxu0 0
      %1333 = vmatpush2.bf16.msra.mxu0 0
      %1334 = vmatprep.subr.bf16.mxu0 0
      %1335 = vmatpush2.bf16.msra.mxu0 0
      %1336 = vmatprep.subr.bf16.mxu0 0
      %1337 = vmatpush2.bf16.msra.mxu0 0
      %1338 = vmatprep.subr.bf16.mxu0 0
      %1339 = vmatpush2.bf16.msra.mxu0 %v1220
      %1340 = vmatprep.mubr.bf16.mxu0 %v1250
      %1341 = vmatmul.mubr.bf16.gmra.mxu0 %v1098
      %v1342 = vpop.f32.mrf.mxu0
      %v1343 = vadd.f32 %v1069, %v1342
      %v1344 = vpop.f32.mrf.mxu0
      %v1345 = vpop.f32.mrf.mxu0
      %v1346 = vadd.f32 %v1074, %v1345
      %v1347 = vpop.f32.mrf.mxu0
      %1348 = vmatprep.mubr.bf16.mxu0 %v1253
      %1349 = vmatmul.mubr.bf16.gmra.mxu0 %v1100
      %v1350 = vpop.f32.mrf.mxu0
      %v1351 = vadd.f32 %v1079, %v1350
      %v1352 = vpop.f32.mrf.mxu0
      %v1353 = vpop.f32.mrf.mxu0
      %v1354 = vadd.f32 %v1084, %v1353
      %v1355 = vpop.f32.mrf.mxu0
      %1356 = vdwg.mxu0
      %v1357 = vmax.f32 %v1290, 0.0
      %v1358 = vmax.f32 %v1292, 0.0
      %v1359 = vmax.f32 %v1343, 0.0
      %v1360 = vmax.f32 %v1294, 0.0
      %v1361 = vmax.f32 %v1296, 0.0
      %v1362 = vmax.f32 %v1346, 0.0
      %v1363 = vmax.f32 %v1300, 0.0
      %v1364 = vmax.f32 %v1302, 0.0
      %v1365 = vmax.f32 %v1351, 0.0
      %v1366 = vmax.f32 %v1304, 0.0
      %v1367 = vmax.f32 %v1306, 0.0
      %v1368 = vmax.f32 %v1354, 0.0
      %v1369 = vpack.c.bf16 %v1360, %v1357
      %v1370 = vpack.c.bf16 %v1361, %v1358
      %v1371 = vpack.c.bf16 %v1362, %v1359
      %v1372 = vpack.c.bf16 %v1366, %v1363
      %v1373 = vpack.c.bf16 %v1367, %v1364
      %v1374 = vpack.c.bf16 %v1368, %v1365
      %v1381 = vunpack.c.l.b16 %v1369
      %v1382 = vunpack.c.l.b16 %v1370
      %v1383 = vunpack.c.l.b16 %v1371
      %v1384 = vunpack.c.h.b16 %v1369
      %v1385 = vunpack.c.h.b16 %v1370
      %v1386 = vunpack.c.h.b16 %v1371
      %v1387 = vunpack.c.l.b16 %v1372
      %v1388 = vunpack.c.l.b16 %v1373
      %v1389 = vunpack.c.l.b16 %v1374
      %v1390 = vunpack.c.h.b16 %v1372
      %v1391 = vunpack.c.h.b16 %v1373
      %v1392 = vunpack.c.h.b16 %v1374
      %v1393 = vpack.c.b16 %v1382, %v1381
      %v1394 = vpack.c.b16 %v1383, %v1383
      %v1395 = vpack.c.b16 %v1385, %v1384
      %v1396 = vpack.c.b16 %v1386, %v1386
      %v1397 = vpack.c.b16 %v1388, %v1387
      %v1398 = vpack.c.b16 %v1389, %v1389
      %v1399 = vpack.c.b16 %v1391, %v1390
      %v1400 = vpack.c.b16 %v1392, %v1392
      %1409 = vst [vmem:[%s251] sm:$0xff] %v1393
      %1410 = vst.msk [vmem:[%s251 + $0x8] sm:$0xf] %vm776, %v1394
      %1411 = vst [vmem:[%s251 + $0xc] sm:$0xff] %v1395
      %1412 = vst.msk [vmem:[%s251 + $0x14] sm:$0xf] %vm776, %v1396
      %1413 = vst [vmem:[%s251 + $0x18] sm:$0xff] %v1397
      %1414 = vst.msk [vmem:[%s251 + $0x20] sm:$0xf] %vm776, %v1398
      %1415 = vst [vmem:[%s251 + $0x24] sm:$0xff] %v1399
      %1416 = vst.msk [vmem:[%s251 + $0x2c] sm:$0xf] %vm776, %v1400
      %p1417 = scmp.lt.s32.totalorder %s17, 1
      %s1418 = scalar_select %p1417, %s17, 1
      %s1419 = smul.addr %s1418, 12
      %s1420 = smul.addr %s1419, 4
      %s1421 = scalar_lea.vmem %s6, %s1420
      // Predicated region
      $region45: #{pretrained_feature_extractor_forward.1} parent=43 // pred_check
        %p1422 = pneg %p166
      $region46: #{pretrained_feature_extractor_forward.1} parent=43 // pred_check_branch
        %1424 = sbr.rel (%p1422) target = $region48
      $region47: #{pretrained_feature_extractor_forward.1} parent=43 // pred_region
        _
      $region48: #{pretrained_feature_extractor_forward.1} parent=43 // pred_fallthru
        _
    $region44: #{pretrained_feature_extractor_forward.1} parent=5 // pred_fallthru
      _
    %p1425 = scmp.le.s32.totalorder 2, %s12
    // Predicated region
    $region49: #{pretrained_feature_extractor_forward.1} parent=5 // pred_check
      %p1426 = pneg %p1425
    $region50: #{pretrained_feature_extractor_forward.1} parent=5 // pred_check_branch
      %1428 = sbr.rel (%p1426) target = $region52
    $region51: #{pretrained_feature_extractor_forward.1} parent=5 // pred_region
      %s1429 = ssub.s32 %s12, 2
      // Predicated region
      $region53: #{pretrained_feature_extractor_forward.1} parent=51 // pred_check
        %p1430 = pneg %p172
      $region54: #{pretrained_feature_extractor_forward.1} parent=51 // pred_check_branch
        %1432 = sbr.rel (%p1430) target = $region56
      $region55: #{pretrained_feature_extractor_forward.1} parent=51 // pred_region
        %p1433 = scmp.lt.s32.totalorder %s18, 1
        %s1434 = scalar_select %p1433, %s18, 1
        %s1435 = smul.addr %s1434, 12
        %s1436 = smul.addr %s1435, 4
        %s1437 = scalar_lea.vmem %s6, %s1436
      $region56: #{pretrained_feature_extractor_forward.1} parent=51 // pred_fallthru
        _
    $region52: #{pretrained_feature_extractor_forward.1} parent=5 // pred_fallthru
      _
  $region6: #{pretrained_feature_extractor_forward.1} parent=0 // loop_footer
    %s16 = sadd.s32 1, %s12
  $region7: #{pretrained_feature_extractor_forward.1} parent=0 // loop_footer_branch
    %11 = sbr.rel target = $region3
  $region8: #{pretrained_feature_extractor_forward.1} parent=0 // loop_exit
    _

</llo_original>
